<compile_context>
chip_gen: v7x
topology: tpu7x:2x2x1
jax: 0.10.0
libtpu: 0.0.40
codegen_flags: <defaults>
</compile_context>

<pallas_src>
import functools
import math

import jax
import jax.numpy as jnp
import numpy as np
from jax.experimental import pallas as pl
from jax.experimental.pallas import tpu as pltpu


# ---------------------------------------------------------------------------
# Kernel 1: Q/K/V projections (row-tiled over T, weights/biases VMEM-resident)
# ---------------------------------------------------------------------------
def _qkv_kernel(x_ref, wq_ref, bq_ref, wk_ref, bk_ref, wv_ref, bv_ref,
                q_ref, k_ref, v_ref):
    x = x_ref[...]
    q_ref[...] = jnp.dot(x, wq_ref[...], preferred_element_type=jnp.float32) + bq_ref[...]
    k_ref[...] = jnp.dot(x, wk_ref[...], preferred_element_type=jnp.float32) + bk_ref[...]
    v_ref[...] = jnp.dot(x, wv_ref[...], preferred_element_type=jnp.float32) + bv_ref[...]


def _layernorm(x, gamma, beta, eps=1e-5):
    mu = jnp.mean(x, axis=-1, keepdims=True)
    var = jnp.mean((x - mu) * (x - mu), axis=-1, keepdims=True)
    return (x - mu) * jax.lax.rsqrt(var + eps) * gamma + beta


# ---------------------------------------------------------------------------
# Kernel 2: attention (all heads per grid step) fused with
#           out-proj + residual + LN1 + FFN + LN2 epilogue.
# ---------------------------------------------------------------------------
def _attn_post_kernel(*refs, nhead, inv_sqrt_dk, has_mask):
    if has_mask:
        (q_ref, k_ref, vt_ref, x_ref, mask_ref,
         wo_ref, bo_ref, g1_ref, be1_ref,
         w1_ref, b1_ref, w2_ref, b2_ref, g2_ref, be2_ref, out_ref) = refs
    else:
        (q_ref, k_ref, vt_ref, x_ref,
         wo_ref, bo_ref, g1_ref, be1_ref,
         w1_ref, b1_ref, w2_ref, b2_ref, g2_ref, be2_ref, out_ref) = refs

    # Mask is loaded once per query tile and reused for all heads.
    mask = mask_ref[...] if has_mask else None

    # TODO(synk): for long T / big d_ff (v7x 64 MiB VMEM) add a key-tile axis with
    # online softmax and tile W1/W2 over d_ff instead of full residency.
    parts = []
    for h in range(nhead):                           # static unroll, H is small
        # Fold 1/sqrt(dk) into the small (dk, tq) operand, not the (tq, T) scores.
        q = q_ref[h] * inv_sqrt_dk                   # (dk, tq)
        s = jax.lax.dot_general(q, k_ref[h], (((0,), (0,)), ((), ())),
                                preferred_element_type=jnp.float32)   # (tq, T)
        # dropout on QK is identity at inference
        if has_mask:
            s = s + mask
        # torch: transpose -> Softmax(dim=1) -> transpose == softmax over keys
        m = jnp.max(s, axis=-1, keepdims=True)
        e = jnp.exp(s - m)
        p = e * pl.reciprocal(jnp.sum(e, axis=-1, keepdims=True), approx=False)
        # V pre-transposed to (T, dv): canonical matmul, no per-step XLU transpose.
        parts.append(jnp.dot(p, vt_ref[h], preferred_element_type=jnp.float32))  # (tq, dv)
    # Single lane-dense (tq, H*dv) value; one full-width store path downstream.
    a_cat = parts[0] if nhead == 1 else jnp.concatenate(parts, axis=-1)

    # out-proj + residual + LN1 + FFN + LN2 (dropout1/2 identity at eval)
    mha = jnp.dot(a_cat, wo_ref[...], preferred_element_type=jnp.float32) + bo_ref[...]
    y = _layernorm(mha + x_ref[...], g1_ref[...], be1_ref[...])
    hid = jnp.maximum(
        jnp.dot(y, w1_ref[...], preferred_element_type=jnp.float32) + b1_ref[...], 0.0)
    f = jnp.dot(hid, w2_ref[...], preferred_element_type=jnp.float32) + b2_ref[...]
    # Module does LN2(FF(X) + dropout2(FF(X))) == LN2(2*FF) at eval; it drops the
    # usual residual to LN1's output — kept bit-for-bit faithful to the spec.
    out_ref[...] = _layernorm(f + f, g2_ref[...], be2_ref[...])


# ---------------------------------------------------------------------------
# Wrapper
# ---------------------------------------------------------------------------
def _vmem_limit_bytes():
    cap = 64 * 1024 * 1024
    try:
        info = pltpu.get_tpu_info()
        cap = int(getattr(info, "vmem_capacity_bytes", cap))
    except Exception:
        pass
    # ~3/4 of physical, capped at 100 MiB: ~96 MiB on 128 MiB parts (v5e/v6e),
    # ~48 MiB on v7x's 64 MiB per-core VMEM.
    return max(32 * 1024 * 1024, min(cap * 3 // 4, 100 * 1024 * 1024))


def _sublane_tile(T, cap=1024):
    """Second-minor tile: multiple of 8 (cap is) or full extent."""
    return T if T <= cap else cap


def _lane_tile(T, cap=512):
    """Minor (lane) tile: multiple of 128 or full extent; >=2 steps at large T."""
    if T <= 256:
        return T
    return min(cap, 128 * max(1, (T // 2) // 128))


def encoder_layer(X, p, *, T, d_model, nhead, dk, dv, d_ff, mask=None):
    H = nhead
    f32 = jnp.float32
    cp = pltpu.CompilerParams(dimension_semantics=("parallel",),
                              vmem_limit_bytes=_vmem_limit_bytes())

    def resident2(shape):
        return pl.BlockSpec(shape, lambda i: (0, 0))

    # ---- kernel 1: Q/K/V projections -------------------------------------
    tm = _sublane_tile(T)
    n_qkv_out = 2 * H * dk + H * dv
    ce_qkv = pl.CostEstimate(
        flops=2 * T * d_model * n_qkv_out,
        transcendentals=0,
        bytes_accessed=4 * (T * d_model + (d_model + 1 + T) * n_qkv_out))
    Qs, Ks, Vs = pl.pallas_call(
        _qkv_kernel,
        out_shape=(jax.ShapeDtypeStruct((T, H * dk), f32),
                   jax.ShapeDtypeStruct((T, H * dk), f32),
                   jax.ShapeDtypeStruct((T, H * dv), f32)),
        grid=(pl.cdiv(T, tm),),
        in_specs=[
            pl.BlockSpec((tm, d_model), lambda i: (i, 0)),
            resident2((d_model, H * dk)), resident2((1, H * dk)),
            resident2((d_model, H * dk)), resident2((1, H * dk)),
            resident2((d_model, H * dv)), resident2((1, H * dv)),
        ],
        out_specs=(
            pl.BlockSpec((tm, H * dk), lambda i: (i, 0)),
            pl.BlockSpec((tm, H * dk), lambda i: (i, 0)),
            pl.BlockSpec((tm, H * dv), lambda i: (i, 0)),
        ),
        compiler_params=cp,
        cost_estimate=ce_qkv,
    )(X, p["Wq"], p["bq"], p["Wk"], p["bk"], p["Wv"], p["bv"])

    # Module's raw (T, H*d) -> (H, d, T) reinterpretation (NOT a head-column split).
    # TODO(synk): verify in HLO this reshape does not lower to a relayout copy; if it
    # does, switch kernel 2's Q/K inputs to memory_space=pl.ANY with manual DMAs.
    Qr = Qs.reshape(H, dk, T)
    Kr = Ks.reshape(H, dk, T)
    # The module then transposes V to (H, T, dv); doing it here (once, outside the
    # kernel) makes the PV matmul canonical with zero in-kernel transposes.
    Vt = jnp.swapaxes(Vs.reshape(H, dv, T), 1, 2)

    # ---- kernel 2: fused attention + out-proj + LN1 + FFN + LN2 ----------
    tq = _lane_tile(T)
    in_specs = [
        pl.BlockSpec((H, dk, tq), lambda i: (0, 0, i)),   # query tile (last axis is T)
        pl.BlockSpec((H, dk, T), lambda i: (0, 0, 0)),    # K resident across tiles
        pl.BlockSpec((H, T, dv), lambda i: (0, 0, 0)),    # V^T resident across tiles
        pl.BlockSpec((tq, d_model), lambda i: (i, 0)),    # X residual row tile
    ]
    operands = [Qr, Kr, Vt, X]
    if mask is not None:                                   # mask=None -> zero mask traffic
        in_specs.append(pl.BlockSpec((tq, T), lambda i: (i, 0)))
        operands.append(mask)
    in_specs += [
        resident2((H * dv, d_model)), resident2((1, d_model)),
        resident2((1, d_model)), resident2((1, d_model)),
        resident2((d_model, d_ff)), resident2((1, d_ff)),
        resident2((d_ff, d_model)), resident2((1, d_model)),
        resident2((1, d_model)), resident2((1, d_model)),
    ]
    operands += [p["Wo"], p["bo"], p["g1"], p["be1"],
                 p["W1"], p["b1"], p["W2"], p["b2"], p["g2"], p["be2"]]

    bytes_attn = 4 * (T * n_qkv_out + 2 * T * d_model
                      + H * dv * d_model + 2 * d_model * d_ff
                      + 5 * d_model + d_ff)
    if mask is not None:
        bytes_attn += 4 * T * T
    ce_attn = pl.CostEstimate(
        flops=(2 * H * T * T * (dk + dv)
               + 2 * T * H * dv * d_model
               + 4 * T * d_model * d_ff),
        transcendentals=H * T * T,
        bytes_accessed=bytes_attn)

    memory = pl.pallas_call(
        functools.partial(_attn_post_kernel, nhead=H,
                          inv_sqrt_dk=1.0 / math.sqrt(dk),
                          has_mask=mask is not None),
        out_shape=jax.ShapeDtypeStruct((T, d_model), f32),
        grid=(pl.cdiv(T, tq),),
        in_specs=in_specs,
        out_specs=pl.BlockSpec((tq, d_model), lambda i: (i, 0)),
        compiler_params=cp,
        cost_estimate=ce_attn,
    )(*operands)
    return memory


# ---------------------------------------------------------------------------
# Deterministic parameter init (PyTorch nn.Linear-style fan-in uniform)
# ---------------------------------------------------------------------------
def init_params(key, d_model, d_ff, dk, dv, nhead):
    def linear(k, fan_in, fan_out):
        k1, k2 = jax.random.split(k)
        bound = 1.0 / math.sqrt(fan_in)
        W = jax.random.uniform(k1, (fan_in, fan_out), jnp.float32, -bound, bound)
        b = jax.random.uniform(k2, (1, fan_out), jnp.float32, -bound, bound)
        return W, b

    ks = jax.random.split(key, 6)
    Wq, bq = linear(ks[0], d_model, dk * nhead)
    Wk, bk = linear(ks[1], d_model, dk * nhead)
    Wv, bv = linear(ks[2], d_model, dv * nhead)
    Wo, bo = linear(ks[3], dv * nhead, d_model)
    W1, b1 = linear(ks[4], d_model, d_ff)
    W2, b2 = linear(ks[5], d_ff, d_model)
    return dict(
        Wq=Wq, bq=bq, Wk=Wk, bk=bk, Wv=Wv, bv=bv, Wo=Wo, bo=bo,
        W1=W1, b1=b1, W2=W2, b2=b2,
        g1=jnp.ones((1, d_model), jnp.float32), be1=jnp.zeros((1, d_model), jnp.float32),
        g2=jnp.ones((1, d_model), jnp.float32), be2=jnp.zeros((1, d_model), jnp.float32),
    )


# ---------------------------------------------------------------------------
# Pure-JAX reference (mirrors the torch forward exactly, eval mode)
# ---------------------------------------------------------------------------
def ref_encoder(X, p, *, T, nhead, dk, dv, mask=None):
    hp = functools.partial(jnp.dot, precision=jax.lax.Precision.HIGHEST)
    H = nhead
    Qs = hp(X, p["Wq"]) + p["bq"]
    Ks = hp(X, p["Wk"]) + p["bk"]
    Vs = hp(X, p["Wv"]) + p["bv"]
    Qh = jnp.transpose(Qs.reshape(H, dk, T), (0, 2, 1))
    Kh = jnp.transpose(Ks.reshape(H, dk, T), (0, 2, 1))
    Vh = jnp.transpose(Vs.reshape(H, dv, T), (0, 2, 1))
    QK = jnp.einsum("htd,hsd->hts", Qh, Kh,
                    precision=jax.lax.Precision.HIGHEST) / math.sqrt(dk)
    if mask is not None:
        QK = QK + mask
    P = jax.nn.softmax(QK, axis=-1)
    A = jnp.einsum("hts,hsd->htd", P, Vh, precision=jax.lax.Precision.HIGHEST)
    A_cat = jnp.transpose(A, (0, 2, 1)).reshape(H * dv, T).T
    mha = hp(A_cat, p["Wo"]) + p["bo"]
    y = _layernorm(mha + X, p["g1"], p["be1"])
    f = hp(jnp.maximum(hp(y, p["W1"]) + p["b1"], 0.0), p["W2"]) + p["b2"]
    return _layernorm(f + f, p["g2"], p["be2"])


if __name__ == "__main__":
    T, d_model, nhead, d_ff, dk, dv = 8, 32, 4, 64, 8, 16
    key = jax.random.PRNGKey(0)
    kx, kp, km = jax.random.split(key, 3)
    X = jax.random.normal(kx, (T, d_model), jnp.float32)
    params = init_params(kp, d_model, d_ff, dk, dv, nhead)

    run = jax.jit(functools.partial(encoder_layer, T=T, d_model=d_model,
                                    nhead=nhead, dk=dk, dv=dv, d_ff=d_ff))

    # default path (mask=None): no (T,T) mask allocated or DMA'd
    out = jax.block_until_ready(run(X, params))
    ref = ref_encoder(X, params, T=T, nhead=nhead, dk=dk, dv=dv)
    assert out.shape == (T, d_model)
    np.testing.assert_allclose(np.asarray(out), np.asarray(ref), rtol=2e-3, atol=2e-3)

    # masked path
    mask = jax.random.normal(km, (T, T), jnp.float32)
    out_m = jax.block_until_ready(run(X, params, mask=mask))
    ref_m = ref_encoder(X, params, T=T, nhead=nhead, dk=dk, dv=dv, mask=mask)
    np.testing.assert_allclose(np.asarray(out_m), np.asarray(ref_m), rtol=2e-3, atol=2e-3)

    print("KERNEL_OK")
</pallas_src>

<mosaic_0001>
module attributes {stable_mosaic.version = 11 : i64} {
  func.func @_qkv_kernel(%arg0: i32, %arg1: memref<8x32xf32, #tpu.memory_space<vmem>>, %arg2: memref<32x32xf32, #tpu.memory_space<vmem>>, %arg3: memref<1x32xf32, #tpu.memory_space<vmem>>, %arg4: memref<32x32xf32, #tpu.memory_space<vmem>>, %arg5: memref<1x32xf32, #tpu.memory_space<vmem>>, %arg6: memref<32x64xf32, #tpu.memory_space<vmem>>, %arg7: memref<1x64xf32, #tpu.memory_space<vmem>>, %arg8: memref<8x32xf32, #tpu.memory_space<vmem>>, %arg9: memref<8x32xf32, #tpu.memory_space<vmem>>, %arg10: memref<8x64xf32, #tpu.memory_space<vmem>>) attributes {dimension_semantics = [#tpu.dimension_semantics<parallel>], iteration_bounds = array<i64: 1>, scalar_prefetch = 0 : i64, scratch_operands = 0 : i64, tpu.core_type = #tpu.core_type<tc>, window_params = [{transform_indices = @transform_0, window_bounds = array<i64: 8, 32>}, {pipeline_mode = #tpu.pipeline_mode<synchronous>, transform_indices = @transform_1, window_bounds = array<i64: 32, 32>}, {pipeline_mode = #tpu.pipeline_mode<synchronous>, transform_indices = @transform_2, window_bounds = array<i64: 1, 32>}, {pipeline_mode = #tpu.pipeline_mode<synchronous>, transform_indices = @transform_3, window_bounds = array<i64: 32, 32>}, {pipeline_mode = #tpu.pipeline_mode<synchronous>, transform_indices = @transform_4, window_bounds = array<i64: 1, 32>}, {pipeline_mode = #tpu.pipeline_mode<synchronous>, transform_indices = @transform_5, window_bounds = array<i64: 32, 64>}, {pipeline_mode = #tpu.pipeline_mode<synchronous>, transform_indices = @transform_6, window_bounds = array<i64: 1, 64>}, {transform_indices = @transform_7, window_bounds = array<i64: 8, 32>}, {transform_indices = @transform_8, window_bounds = array<i64: 8, 32>}, {transform_indices = @transform_9, window_bounds = array<i64: 8, 64>}]} {
    %c0 = arith.constant 0 : index
    %c0_0 = arith.constant 0 : index
    %0 = vector.load %arg1[%c0, %c0_0] : memref<8x32xf32, #tpu.memory_space<vmem>>, vector<8x32xf32>
    %c0_1 = arith.constant 0 : index
    %c0_2 = arith.constant 0 : index
    %1 = vector.load %arg2[%c0_1, %c0_2] : memref<32x32xf32, #tpu.memory_space<vmem>>, vector<32x32xf32>
    %cst = arith.constant dense<0.000000e+00> : vector<8x32xf32>
    %2 = tpu.matmul %0, %1, %cst {dimension_numbers = #tpu.dot_dimension_numbers<[1], [0], [0], [1], [0, 0, 1, 1], [], []>} : vector<8x32xf32>, vector<32x32xf32>, vector<8x32xf32> -> vector<8x32xf32>
    %c0_3 = arith.constant 0 : index
    %c0_4 = arith.constant 0 : index
    %3 = vector.load %arg3[%c0_3, %c0_4] : memref<1x32xf32, #tpu.memory_space<vmem>>, vector<1x32xf32>
    %4 = vector.broadcast %3 : vector<1x32xf32> to vector<8x32xf32>
    %5 = arith.addf %2, %4 : vector<8x32xf32>
    %c0_5 = arith.constant 0 : index
    %c0_6 = arith.constant 0 : index
    %6 = vector.load %arg8[%c0_5, %c0_6] : memref<8x32xf32, #tpu.memory_space<vmem>>, vector<8x32xf32>
    tpu.vector_store %arg8[%c0_5, %c0_6], %5 {strides = array<i32>} : memref<8x32xf32, #tpu.memory_space<vmem>>, vector<8x32xf32>,
    %c0_7 = arith.constant 0 : index
    %c0_8 = arith.constant 0 : index
    %7 = vector.load %arg4[%c0_7, %c0_8] : memref<32x32xf32, #tpu.memory_space<vmem>>, vector<32x32xf32>
    %cst_9 = arith.constant dense<0.000000e+00> : vector<8x32xf32>
    %8 = tpu.matmul %0, %7, %cst_9 {dimension_numbers = #tpu.dot_dimension_numbers<[1], [0], [0], [1], [0, 0, 1, 1], [], []>} : vector<8x32xf32>, vector<32x32xf32>, vector<8x32xf32> -> vector<8x32xf32>
    %c0_10 = arith.constant 0 : index
    %c0_11 = arith.constant 0 : index
    %9 = vector.load %arg5[%c0_10, %c0_11] : memref<1x32xf32, #tpu.memory_space<vmem>>, vector<1x32xf32>
    %10 = vector.broadcast %9 : vector<1x32xf32> to vector<8x32xf32>
    %11 = arith.addf %8, %10 : vector<8x32xf32>
    %c0_12 = arith.constant 0 : index
    %c0_13 = arith.constant 0 : index
    %12 = vector.load %arg9[%c0_12, %c0_13] : memref<8x32xf32, #tpu.memory_space<vmem>>, vector<8x32xf32>
    tpu.vector_store %arg9[%c0_12, %c0_13], %11 {strides = array<i32>} : memref<8x32xf32, #tpu.memory_space<vmem>>, vector<8x32xf32>,
    %c0_14 = arith.constant 0 : index
    %c0_15 = arith.constant 0 : index
    %13 = vector.load %arg6[%c0_14, %c0_15] : memref<32x64xf32, #tpu.memory_space<vmem>>, vector<32x64xf32>
    %cst_16 = arith.constant dense<0.000000e+00> : vector<8x64xf32>
    %14 = tpu.matmul %0, %13, %cst_16 {dimension_numbers = #tpu.dot_dimension_numbers<[1], [0], [0], [1], [0, 0, 1, 1], [], []>} : vector<8x32xf32>, vector<32x64xf32>, vector<8x64xf32> -> vector<8x64xf32>
    %c0_17 = arith.constant 0 : index
    %c0_18 = arith.constant 0 : index
    %15 = vector.load %arg7[%c0_17, %c0_18] : memref<1x64xf32, #tpu.memory_space<vmem>>, vector<1x64xf32>
    %16 = vector.broadcast %15 : vector<1x64xf32> to vector<8x64xf32>
    %17 = arith.addf %14, %16 : vector<8x64xf32>
    %c0_19 = arith.constant 0 : index
    %c0_20 = arith.constant 0 : index
    %18 = vector.load %arg10[%c0_19, %c0_20] : memref<8x64xf32, #tpu.memory_space<vmem>>, vector<8x64xf32>
    tpu.vector_store %arg10[%c0_19, %c0_20], %17 {strides = array<i32>} : memref<8x64xf32, #tpu.memory_space<vmem>>, vector<8x64xf32>,
    return
  }
  func.func @transform_0(%arg0: i32) -> (i32, i32) {
    %c0_i32 = arith.constant 0 : i32
    %c0_i32_0 = arith.constant 0 : i32
    return %arg0, %c0_i32 : i32, i32
  }
  func.func @transform_1(%arg0: i32) -> (i32, i32) {
    %c0_i32 = arith.constant 0 : i32
    %c0_i32_0 = arith.constant 0 : i32
    %c0_i32_1 = arith.constant 0 : i32
    return %c0_i32, %c0_i32_0 : i32, i32
  }
  func.func @transform_2(%arg0: i32) -> (i32, i32) {
    %c0_i32 = arith.constant 0 : i32
    %c0_i32_0 = arith.constant 0 : i32
    %c0_i32_1 = arith.constant 0 : i32
    return %c0_i32, %c0_i32_0 : i32, i32
  }
  func.func @transform_3(%arg0: i32) -> (i32, i32) {
    %c0_i32 = arith.constant 0 : i32
    %c0_i32_0 = arith.constant 0 : i32
    %c0_i32_1 = arith.constant 0 : i32
    return %c0_i32, %c0_i32_0 : i32, i32
  }
  func.func @transform_4(%arg0: i32) -> (i32, i32) {
    %c0_i32 = arith.constant 0 : i32
    %c0_i32_0 = arith.constant 0 : i32
    %c0_i32_1 = arith.constant 0 : i32
    return %c0_i32, %c0_i32_0 : i32, i32
  }
  func.func @transform_5(%arg0: i32) -> (i32, i32) {
    %c0_i32 = arith.constant 0 : i32
    %c0_i32_0 = arith.constant 0 : i32
    %c0_i32_1 = arith.constant 0 : i32
    return %c0_i32, %c0_i32_0 : i32, i32
  }
  func.func @transform_6(%arg0: i32) -> (i32, i32) {
    %c0_i32 = arith.constant 0 : i32
    %c0_i32_0 = arith.constant 0 : i32
    %c0_i32_1 = arith.constant 0 : i32
    return %c0_i32, %c0_i32_0 : i32, i32
  }
  func.func @transform_7(%arg0: i32) -> (i32, i32) {
    %c0_i32 = arith.constant 0 : i32
    %c0_i32_0 = arith.constant 0 : i32
    return %arg0, %c0_i32 : i32, i32
  }
  func.func @transform_8(%arg0: i32) -> (i32, i32) {
    %c0_i32 = arith.constant 0 : i32
    %c0_i32_0 = arith.constant 0 : i32
    return %arg0, %c0_i32 : i32, i32
  }
  func.func @transform_9(%arg0: i32) -> (i32, i32) {
    %c0_i32 = arith.constant 0 : i32
    %c0_i32_0 = arith.constant 0 : i32
    return %arg0, %c0_i32 : i32, i32
  }
}

module attributes {stable_mosaic.version = 11 : i64} {
  func.func @_attn_post_kernel(%arg0: i32, %arg1: memref<4x8x8xf32, #tpu.memory_space<vmem>>, %arg2: memref<4x8x8xf32, #tpu.memory_space<vmem>>, %arg3: memref<4x8x16xf32, #tpu.memory_space<vmem>>, %arg4: memref<8x32xf32, #tpu.memory_space<vmem>>, %arg5: memref<64x32xf32, #tpu.memory_space<vmem>>, %arg6: memref<1x32xf32, #tpu.memory_space<vmem>>, %arg7: memref<1x32xf32, #tpu.memory_space<vmem>>, %arg8: memref<1x32xf32, #tpu.memory_space<vmem>>, %arg9: memref<32x64xf32, #tpu.memory_space<vmem>>, %arg10: memref<1x64xf32, #tpu.memory_space<vmem>>, %arg11: memref<64x32xf32, #tpu.memory_space<vmem>>, %arg12: memref<1x32xf32, #tpu.memory_space<vmem>>, %arg13: memref<1x32xf32, #tpu.memory_space<vmem>>, %arg14: memref<1x32xf32, #tpu.memory_space<vmem>>, %arg15: memref<8x32xf32, #tpu.memory_space<vmem>>) attributes {dimension_semantics = [#tpu.dimension_semantics<parallel>], iteration_bounds = array<i64: 1>, scalar_prefetch = 0 : i64, scratch_operands = 0 : i64, tpu.core_type = #tpu.core_type<tc>, window_params = [{transform_indices = @transform_0, window_bounds = array<i64: 4, 8, 8>}, {pipeline_mode = #tpu.pipeline_mode<synchronous>, transform_indices = @transform_1, window_bounds = array<i64: 4, 8, 8>}, {pipeline_mode = #tpu.pipeline_mode<synchronous>, transform_indices = @transform_2, window_bounds = array<i64: 4, 8, 16>}, {transform_indices = @transform_3, window_bounds = array<i64: 8, 32>}, {pipeline_mode = #tpu.pipeline_mode<synchronous>, transform_indices = @transform_4, window_bounds = array<i64: 64, 32>}, {pipeline_mode = #tpu.pipeline_mode<synchronous>, transform_indices = @transform_5, window_bounds = array<i64: 1, 32>}, {pipeline_mode = #tpu.pipeline_mode<synchronous>, transform_indices = @transform_6, window_bounds = array<i64: 1, 32>}, {pipeline_mode = #tpu.pipeline_mode<synchronous>, transform_indices = @transform_7, window_bounds = array<i64: 1, 32>}, {pipeline_mode = #tpu.pipeline_mode<synchronous>, transform_indices = @transform_8, window_bounds = array<i64: 32, 64>}, {pipeline_mode = #tpu.pipeline_mode<synchronous>, transform_indices = @transform_9, window_bounds = array<i64: 1, 64>}, {pipeline_mode = #tpu.pipeline_mode<synchronous>, transform_indices = @transform_10, window_bounds = array<i64: 64, 32>}, {pipeline_mode = #tpu.pipeline_mode<synchronous>, transform_indices = @transform_11, window_bounds = array<i64: 1, 32>}, {pipeline_mode = #tpu.pipeline_mode<synchronous>, transform_indices = @transform_12, window_bounds = array<i64: 1, 32>}, {pipeline_mode = #tpu.pipeline_mode<synchronous>, transform_indices = @transform_13, window_bounds = array<i64: 1, 32>}, {transform_indices = @transform_14, window_bounds = array<i64: 8, 32>}]} {
    %c0 = arith.constant 0 : index
    %c0_0 = arith.constant 0 : index
    %c0_1 = arith.constant 0 : index
    %0 = vector.load %arg1[%c0, %c0_0, %c0_1] : memref<4x8x8xf32, #tpu.memory_space<vmem>>, vector<1x8x8xf32>
    %1 = vector.shape_cast %0 : vector<1x8x8xf32> to vector<8x8xf32>
    %cst = arith.constant 0.353553385 : f32
    %2 = vector.broadcast %cst : f32 to vector<8x8xf32>
    %3 = arith.mulf %1, %2 : vector<8x8xf32>
    %c0_2 = arith.constant 0 : index
    %c0_3 = arith.constant 0 : index
    %c0_4 = arith.constant 0 : index
    %4 = vector.load %arg2[%c0_2, %c0_3, %c0_4] : memref<4x8x8xf32, #tpu.memory_space<vmem>>, vector<1x8x8xf32>
    %5 = vector.shape_cast %4 : vector<1x8x8xf32> to vector<8x8xf32>
    %cst_5 = arith.constant dense<0.000000e+00> : vector<8x8xf32>
    %6 = tpu.matmul %3, %5, %cst_5 {dimension_numbers = #tpu.dot_dimension_numbers<[0], [0], [1], [1], [0, 1, 1, 1], [], []>} : vector<8x8xf32>, vector<8x8xf32>, vector<8x8xf32> -> vector<8x8xf32>
    %cst_6 = arith.constant dense<0xFF800000> : vector<8xf32>
    %7 = vector.multi_reduction <maximumf>, %6, %cst_6 [1] : vector<8x8xf32> to vector<8xf32>
    %8 = vector.shape_cast %7 : vector<8xf32> to vector<8x1xf32>
    %9 = vector.broadcast %8 : vector<8x1xf32> to vector<8x8xf32>
    %10 = arith.subf %6, %9 : vector<8x8xf32>
    %11 = math.exp %10 : vector<8x8xf32>
    %cst_7 = arith.constant dense<0.000000e+00> : vector<8xf32>
    %12 = vector.multi_reduction <add>, %11, %cst_7 [1] : vector<8x8xf32> to vector<8xf32>
    %13 = vector.shape_cast %12 : vector<8xf32> to vector<8x1xf32>
    %14 = tpu.reciprocal %13 : vector<8x1xf32> -> vector<8x1xf32>
    %15 = vector.broadcast %14 : vector<8x1xf32> to vector<8x8xf32>
    %16 = arith.mulf %11, %15 : vector<8x8xf32>
    %c0_8 = arith.constant 0 : index
    %c0_9 = arith.constant 0 : index
    %c0_10 = arith.constant 0 : index
    %17 = vector.load %arg3[%c0_8, %c0_9, %c0_10] : memref<4x8x16xf32, #tpu.memory_space<vmem>>, vector<1x8x16xf32>
    %18 = vector.shape_cast %17 : vector<1x8x16xf32> to vector<8x16xf32>
    %cst_11 = arith.constant dense<0.000000e+00> : vector<8x16xf32>
    %19 = tpu.matmul %16, %18, %cst_11 {dimension_numbers = #tpu.dot_dimension_numbers<[1], [0], [0], [1], [0, 0, 1, 1], [], []>} : vector<8x8xf32>, vector<8x16xf32>, vector<8x16xf32> -> vector<8x16xf32>
    %c1 = arith.constant 1 : index
    %c0_12 = arith.constant 0 : index
    %c0_13 = arith.constant 0 : index
    %20 = vector.load %arg1[%c1, %c0_12, %c0_13] : memref<4x8x8xf32, #tpu.memory_space<vmem>>, vector<1x8x8xf32>
    %21 = vector.shape_cast %20 : vector<1x8x8xf32> to vector<8x8xf32>
    %cst_14 = arith.constant 0.353553385 : f32
    %22 = vector.broadcast %cst_14 : f32 to vector<8x8xf32>
    %23 = arith.mulf %21, %22 : vector<8x8xf32>
    %c1_15 = arith.constant 1 : index
    %c0_16 = arith.constant 0 : index
    %c0_17 = arith.constant 0 : index
    %24 = vector.load %arg2[%c1_15, %c0_16, %c0_17] : memref<4x8x8xf32, #tpu.memory_space<vmem>>, vector<1x8x8xf32>
    %25 = vector.shape_cast %24 : vector<1x8x8xf32> to vector<8x8xf32>
    %cst_18 = arith.constant dense<0.000000e+00> : vector<8x8xf32>
    %26 = tpu.matmul %23, %25, %cst_18 {dimension_numbers = #tpu.dot_dimension_numbers<[0], [0], [1], [1], [0, 1, 1, 1], [], []>} : vector<8x8xf32>, vector<8x8xf32>, vector<8x8xf32> -> vector<8x8xf32>
    %cst_19 = arith.constant dense<0xFF800000> : vector<8xf32>
    %27 = vector.multi_reduction <maximumf>, %26, %cst_19 [1] : vector<8x8xf32> to vector<8xf32>
    %28 = vector.shape_cast %27 : vector<8xf32> to vector<8x1xf32>
    %29 = vector.broadcast %28 : vector<8x1xf32> to vector<8x8xf32>
    %30 = arith.subf %26, %29 : vector<8x8xf32>
    %31 = math.exp %30 : vector<8x8xf32>
    %cst_20 = arith.constant dense<0.000000e+00> : vector<8xf32>
    %32 = vector.multi_reduction <add>, %31, %cst_20 [1] : vector<8x8xf32> to vector<8xf32>
    %33 = vector.shape_cast %32 : vector<8xf32> to vector<8x1xf32>
    %34 = tpu.reciprocal %33 : vector<8x1xf32> -> vector<8x1xf32>
    %35 = vector.broadcast %34 : vector<8x1xf32> to vector<8x8xf32>
    %36 = arith.mulf %31, %35 : vector<8x8xf32>
    %c1_21 = arith.constant 1 : index
    %c0_22 = arith.constant 0 : index
    %c0_23 = arith.constant 0 : index
    %37 = vector.load %arg3[%c1_21, %c0_22, %c0_23] : memref<4x8x16xf32, #tpu.memory_space<vmem>>, vector<1x8x16xf32>
    %38 = vector.shape_cast %37 : vector<1x8x16xf32> to vector<8x16xf32>
    %cst_24 = arith.constant dense<0.000000e+00> : vector<8x16xf32>
    %39 = tpu.matmul %36, %38, %cst_24 {dimension_numbers = #tpu.dot_dimension_numbers<[1], [0], [0], [1], [0, 0, 1, 1], [], []>} : vector<8x8xf32>, vector<8x16xf32>, vector<8x16xf32> -> vector<8x16xf32>
    %c2 = arith.constant 2 : index
    %c0_25 = arith.constant 0 : index
    %c0_26 = arith.constant 0 : index
    %40 = vector.load %arg1[%c2, %c0_25, %c0_26] : memref<4x8x8xf32, #tpu.memory_space<vmem>>, vector<1x8x8xf32>
    %41 = vector.shape_cast %40 : vector<1x8x8xf32> to vector<8x8xf32>
    %cst_27 = arith.constant 0.353553385 : f32
    %42 = vector.broadcast %cst_27 : f32 to vector<8x8xf32>
    %43 = arith.mulf %41, %42 : vector<8x8xf32>
    %c2_28 = arith.constant 2 : index
    %c0_29 = arith.constant 0 : index
    %c0_30 = arith.constant 0 : index
    %44 = vector.load %arg2[%c2_28, %c0_29, %c0_30] : memref<4x8x8xf32, #tpu.memory_space<vmem>>, vector<1x8x8xf32>
    %45 = vector.shape_cast %44 : vector<1x8x8xf32> to vector<8x8xf32>
    %cst_31 = arith.constant dense<0.000000e+00> : vector<8x8xf32>
    %46 = tpu.matmul %43, %45, %cst_31 {dimension_numbers = #tpu.dot_dimension_numbers<[0], [0], [1], [1], [0, 1, 1, 1], [], []>} : vector<8x8xf32>, vector<8x8xf32>, vector<8x8xf32> -> vector<8x8xf32>
    %cst_32 = arith.constant dense<0xFF800000> : vector<8xf32>
    %47 = vector.multi_reduction <maximumf>, %46, %cst_32 [1] : vector<8x8xf32> to vector<8xf32>
    %48 = vector.shape_cast %47 : vector<8xf32> to vector<8x1xf32>
    %49 = vector.broadcast %48 : vector<8x1xf32> to vector<8x8xf32>
    %50 = arith.subf %46, %49 : vector<8x8xf32>
    %51 = math.exp %50 : vector<8x8xf32>
    %cst_33 = arith.constant dense<0.000000e+00> : vector<8xf32>
    %52 = vector.multi_reduction <add>, %51, %cst_33 [1] : vector<8x8xf32> to vector<8xf32>
    %53 = vector.shape_cast %52 : vector<8xf32> to vector<8x1xf32>
    %54 = tpu.reciprocal %53 : vector<8x1xf32> -> vector<8x1xf32>
    %55 = vector.broadcast %54 : vector<8x1xf32> to vector<8x8xf32>
    %56 = arith.mulf %51, %55 : vector<8x8xf32>
    %c2_34 = arith.constant 2 : index
    %c0_35 = arith.constant 0 : index
    %c0_36 = arith.constant 0 : index
    %57 = vector.load %arg3[%c2_34, %c0_35, %c0_36] : memref<4x8x16xf32, #tpu.memory_space<vmem>>, vector<1x8x16xf32>
    %58 = vector.shape_cast %57 : vector<1x8x16xf32> to vector<8x16xf32>
    %cst_37 = arith.constant dense<0.000000e+00> : vector<8x16xf32>
    %59 = tpu.matmul %56, %58, %cst_37 {dimension_numbers = #tpu.dot_dimension_numbers<[1], [0], [0], [1], [0, 0, 1, 1], [], []>} : vector<8x8xf32>, vector<8x16xf32>, vector<8x16xf32> -> vector<8x16xf32>
    %c3 = arith.constant 3 : index
    %c0_38 = arith.constant 0 : index
    %c0_39 = arith.constant 0 : index
    %60 = vector.load %arg1[%c3, %c0_38, %c0_39] : memref<4x8x8xf32, #tpu.memory_space<vmem>>, vector<1x8x8xf32>
    %61 = vector.shape_cast %60 : vector<1x8x8xf32> to vector<8x8xf32>
    %cst_40 = arith.constant 0.353553385 : f32
    %62 = vector.broadcast %cst_40 : f32 to vector<8x8xf32>
    %63 = arith.mulf %61, %62 : vector<8x8xf32>
    %c3_41 = arith.constant 3 : index
    %c0_42 = arith.constant 0 : index
    %c0_43 = arith.constant 0 : index
    %64 = vector.load %arg2[%c3_41, %c0_42, %c0_43] : memref<4x8x8xf32, #tpu.memory_space<vmem>>, vector<1x8x8xf32>
    %65 = vector.shape_cast %64 : vector<1x8x8xf32> to vector<8x8xf32>
    %cst_44 = arith.constant dense<0.000000e+00> : vector<8x8xf32>
    %66 = tpu.matmul %63, %65, %cst_44 {dimension_numbers = #tpu.dot_dimension_numbers<[0], [0], [1], [1], [0, 1, 1, 1], [], []>} : vector<8x8xf32>, vector<8x8xf32>, vector<8x8xf32> -> vector<8x8xf32>
    %cst_45 = arith.constant dense<0xFF800000> : vector<8xf32>
    %67 = vector.multi_reduction <maximumf>, %66, %cst_45 [1] : vector<8x8xf32> to vector<8xf32>
    %68 = vector.shape_cast %67 : vector<8xf32> to vector<8x1xf32>
    %69 = vector.broadcast %68 : vector<8x1xf32> to vector<8x8xf32>
    %70 = arith.subf %66, %69 : vector<8x8xf32>
    %71 = math.exp %70 : vector<8x8xf32>
    %cst_46 = arith.constant dense<0.000000e+00> : vector<8xf32>
    %72 = vector.multi_reduction <add>, %71, %cst_46 [1] : vector<8x8xf32> to vector<8xf32>
    %73 = vector.shape_cast %72 : vector<8xf32> to vector<8x1xf32>
    %74 = tpu.reciprocal %73 : vector<8x1xf32> -> vector<8x1xf32>
    %75 = vector.broadcast %74 : vector<8x1xf32> to vector<8x8xf32>
    %76 = arith.mulf %71, %75 : vector<8x8xf32>
    %c3_47 = arith.constant 3 : index
    %c0_48 = arith.constant 0 : index
    %c0_49 = arith.constant 0 : index
    %77 = vector.load %arg3[%c3_47, %c0_48, %c0_49] : memref<4x8x16xf32, #tpu.memory_space<vmem>>, vector<1x8x16xf32>
    %78 = vector.shape_cast %77 : vector<1x8x16xf32> to vector<8x16xf32>
    %cst_50 = arith.constant dense<0.000000e+00> : vector<8x16xf32>
    %79 = tpu.matmul %76, %78, %cst_50 {dimension_numbers = #tpu.dot_dimension_numbers<[1], [0], [0], [1], [0, 0, 1, 1], [], []>} : vector<8x8xf32>, vector<8x16xf32>, vector<8x16xf32> -> vector<8x16xf32>
    %80 = tpu.concatenate %19, %39, %59, %79 in 1 : vector<8x16xf32>, vector<8x16xf32>, vector<8x16xf32>, vector<8x16xf32> -> vector<8x64xf32>
    %c0_51 = arith.constant 0 : index
    %c0_52 = arith.constant 0 : index
    %81 = vector.load %arg5[%c0_51, %c0_52] : memref<64x32xf32, #tpu.memory_space<vmem>>, vector<64x32xf32>
    %cst_53 = arith.constant dense<0.000000e+00> : vector<8x32xf32>
    %82 = tpu.matmul %80, %81, %cst_53 {dimension_numbers = #tpu.dot_dimension_numbers<[1], [0], [0], [1], [0, 0, 1, 1], [], []>} : vector<8x64xf32>, vector<64x32xf32>, vector<8x32xf32> -> vector<8x32xf32>
    %c0_54 = arith.constant 0 : index
    %c0_55 = arith.constant 0 : index
    %83 = vector.load %arg6[%c0_54, %c0_55] : memref<1x32xf32, #tpu.memory_space<vmem>>, vector<1x32xf32>
    %84 = vector.broadcast %83 : vector<1x32xf32> to vector<8x32xf32>
    %85 = arith.addf %82, %84 : vector<8x32xf32>
    %c0_56 = arith.constant 0 : index
    %c0_57 = arith.constant 0 : index
    %86 = vector.load %arg4[%c0_56, %c0_57] : memref<8x32xf32, #tpu.memory_space<vmem>>, vector<8x32xf32>
    %87 = arith.addf %85, %86 : vector<8x32xf32>
    %c0_58 = arith.constant 0 : index
    %c0_59 = arith.constant 0 : index
    %88 = vector.load %arg7[%c0_58, %c0_59] : memref<1x32xf32, #tpu.memory_space<vmem>>, vector<1x32xf32>
    %c0_60 = arith.constant 0 : index
    %c0_61 = arith.constant 0 : index
    %89 = vector.load %arg8[%c0_60, %c0_61] : memref<1x32xf32, #tpu.memory_space<vmem>>, vector<1x32xf32>
    %cst_62 = arith.constant dense<0.000000e+00> : vector<8xf32>
    %90 = vector.multi_reduction <add>, %87, %cst_62 [1] : vector<8x32xf32> to vector<8xf32>
    %91 = vector.shape_cast %90 : vector<8xf32> to vector<8x1xf32>
    %cst_63 = arith.constant 3.200000e+01 : f32
    %92 = vector.broadcast %cst_63 : f32 to vector<8x1xf32>
    %93 = arith.divf %91, %92 : vector<8x1xf32>
    %94 = vector.broadcast %93 : vector<8x1xf32> to vector<8x32xf32>
    %95 = arith.subf %87, %94 : vector<8x32xf32>
    %96 = vector.broadcast %93 : vector<8x1xf32> to vector<8x32xf32>
    %97 = arith.subf %87, %96 : vector<8x32xf32>
    %98 = arith.mulf %95, %97 : vector<8x32xf32>
    %cst_64 = arith.constant dense<0.000000e+00> : vector<8xf32>
    %99 = vector.multi_reduction <add>, %98, %cst_64 [1] : vector<8x32xf32> to vector<8xf32>
    %100 = vector.shape_cast %99 : vector<8xf32> to vector<8x1xf32>
    %cst_65 = arith.constant 3.200000e+01 : f32
    %101 = vector.broadcast %cst_65 : f32 to vector<8x1xf32>
    %102 = arith.divf %100, %101 : vector<8x1xf32>
    %103 = vector.broadcast %93 : vector<8x1xf32> to vector<8x32xf32>
    %104 = arith.subf %87, %103 : vector<8x32xf32>
    %cst_66 = arith.constant 9.99999974E-6 : f32
    %105 = vector.broadcast %cst_66 : f32 to vector<8x1xf32>
    %106 = arith.addf %102, %105 : vector<8x1xf32>
    %107 = math.rsqrt %106 : vector<8x1xf32>
    %108 = vector.broadcast %107 : vector<8x1xf32> to vector<8x32xf32>
    %109 = arith.mulf %104, %108 : vector<8x32xf32>
    %110 = vector.broadcast %88 : vector<1x32xf32> to vector<8x32xf32>
    %111 = arith.mulf %109, %110 : vector<8x32xf32>
    %112 = vector.broadcast %89 : vector<1x32xf32> to vector<8x32xf32>
    %113 = arith.addf %111, %112 : vector<8x32xf32>
    %c0_67 = arith.constant 0 : index
    %c0_68 = arith.constant 0 : index
    %114 = vector.load %arg9[%c0_67, %c0_68] : memref<32x64xf32, #tpu.memory_space<vmem>>, vector<32x64xf32>
    %cst_69 = arith.constant dense<0.000000e+00> : vector<8x64xf32>
    %115 = tpu.matmul %113, %114, %cst_69 {dimension_numbers = #tpu.dot_dimension_numbers<[1], [0], [0], [1], [0, 0, 1, 1], [], []>} : vector<8x32xf32>, vector<32x64xf32>, vector<8x64xf32> -> vector<8x64xf32>
    %c0_70 = arith.constant 0 : index
    %c0_71 = arith.constant 0 : index
    %116 = vector.load %arg10[%c0_70, %c0_71] : memref<1x64xf32, #tpu.memory_space<vmem>>, vector<1x64xf32>
    %117 = vector.broadcast %116 : vector<1x64xf32> to vector<8x64xf32>
    %118 = arith.addf %115, %117 : vector<8x64xf32>
    %cst_72 = arith.constant 0.000000e+00 : f32
    %119 = vector.broadcast %cst_72 : f32 to vector<8x64xf32>
    %120 = arith.maximumf %118, %119 : vector<8x64xf32>
    %c0_73 = arith.constant 0 : index
    %c0_74 = arith.constant 0 : index
    %121 = vector.load %arg11[%c0_73, %c0_74] : memref<64x32xf32, #tpu.memory_space<vmem>>, vector<64x32xf32>
    %cst_75 = arith.constant dense<0.000000e+00> : vector<8x32xf32>
    %122 = tpu.matmul %120, %121, %cst_75 {dimension_numbers = #tpu.dot_dimension_numbers<[1], [0], [0], [1], [0, 0, 1, 1], [], []>} : vector<8x64xf32>, vector<64x32xf32>, vector<8x32xf32> -> vector<8x32xf32>
    %c0_76 = arith.constant 0 : index
    %c0_77 = arith.constant 0 : index
    %123 = vector.load %arg12[%c0_76, %c0_77] : memref<1x32xf32, #tpu.memory_space<vmem>>, vector<1x32xf32>
    %124 = vector.broadcast %123 : vector<1x32xf32> to vector<8x32xf32>
    %125 = arith.addf %122, %124 : vector<8x32xf32>
    %126 = arith.addf %125, %125 : vector<8x32xf32>
    %c0_78 = arith.constant 0 : index
    %c0_79 = arith.constant 0 : index
    %127 = vector.load %arg13[%c0_78, %c0_79] : memref<1x32xf32, #tpu.memory_space<vmem>>, vector<1x32xf32>
    %c0_80 = arith.constant 0 : index
    %c0_81 = arith.constant 0 : index
    %128 = vector.load %arg14[%c0_80, %c0_81] : memref<1x32xf32, #tpu.memory_space<vmem>>, vector<1x32xf32>
    %cst_82 = arith.constant dense<0.000000e+00> : vector<8xf32>
    %129 = vector.multi_reduction <add>, %126, %cst_82 [1] : vector<8x32xf32> to vector<8xf32>
    %130 = vector.shape_cast %129 : vector<8xf32> to vector<8x1xf32>
    %cst_83 = arith.constant 3.200000e+01 : f32
    %131 = vector.broadcast %cst_83 : f32 to vector<8x1xf32>
    %132 = arith.divf %130, %131 : vector<8x1xf32>
    %133 = vector.broadcast %132 : vector<8x1xf32> to vector<8x32xf32>
    %134 = arith.subf %126, %133 : vector<8x32xf32>
    %135 = vector.broadcast %132 : vector<8x1xf32> to vector<8x32xf32>
    %136 = arith.subf %126, %135 : vector<8x32xf32>
    %137 = arith.mulf %134, %136 : vector<8x32xf32>
    %cst_84 = arith.constant dense<0.000000e+00> : vector<8xf32>
    %138 = vector.multi_reduction <add>, %137, %cst_84 [1] : vector<8x32xf32> to vector<8xf32>
    %139 = vector.shape_cast %138 : vector<8xf32> to vector<8x1xf32>
    %cst_85 = arith.constant 3.200000e+01 : f32
    %140 = vector.broadcast %cst_85 : f32 to vector<8x1xf32>
    %141 = arith.divf %139, %140 : vector<8x1xf32>
    %142 = vector.broadcast %132 : vector<8x1xf32> to vector<8x32xf32>
    %143 = arith.subf %126, %142 : vector<8x32xf32>
    %cst_86 = arith.constant 9.99999974E-6 : f32
    %144 = vector.broadcast %cst_86 : f32 to vector<8x1xf32>
    %145 = arith.addf %141, %144 : vector<8x1xf32>
    %146 = math.rsqrt %145 : vector<8x1xf32>
    %147 = vector.broadcast %146 : vector<8x1xf32> to vector<8x32xf32>
    %148 = arith.mulf %143, %147 : vector<8x32xf32>
    %149 = vector.broadcast %127 : vector<1x32xf32> to vector<8x32xf32>
    %150 = arith.mulf %148, %149 : vector<8x32xf32>
    %151 = vector.broadcast %128 : vector<1x32xf32> to vector<8x32xf32>
    %152 = arith.addf %150, %151 : vector<8x32xf32>
    %c0_87 = arith.constant 0 : index
    %c0_88 = arith.constant 0 : index
    %153 = vector.load %arg15[%c0_87, %c0_88] : memref<8x32xf32, #tpu.memory_space<vmem>>, vector<8x32xf32>
    tpu.vector_store %arg15[%c0_87, %c0_88], %152 {strides = array<i32>} : memref<8x32xf32, #tpu.memory_space<vmem>>, vector<8x32xf32>,
    return
  }
  func.func @transform_0(%arg0: i32) -> (i32, i32, i32) {
    %c0_i32 = arith.constant 0 : i32
    %c0_i32_0 = arith.constant 0 : i32
    %c0_i32_1 = arith.constant 0 : i32
    return %c0_i32, %c0_i32_0, %arg0 : i32, i32, i32
  }
  func.func @transform_1(%arg0: i32) -> (i32, i32, i32) {
    %c0_i32 = arith.constant 0 : i32
    %c0_i32_0 = arith.constant 0 : i32
    %c0_i32_1 = arith.constant 0 : i32
    %c0_i32_2 = arith.constant 0 : i32
    return %c0_i32, %c0_i32_0, %c0_i32_1 : i32, i32, i32
  }
  func.func @transform_2(%arg0: i32) -> (i32, i32, i32) {
    %c0_i32 = arith.constant 0 : i32
    %c0_i32_0 = arith.constant 0 : i32
    %c0_i32_1 = arith.constant 0 : i32
    %c0_i32_2 = arith.constant 0 : i32
    return %c0_i32, %c0_i32_0, %c0_i32_1 : i32, i32, i32
  }
  func.func @transform_3(%arg0: i32) -> (i32, i32) {
    %c0_i32 = arith.constant 0 : i32
    %c0_i32_0 = arith.constant 0 : i32
    return %arg0, %c0_i32 : i32, i32
  }
  func.func @transform_4(%arg0: i32) -> (i32, i32) {
    %c0_i32 = arith.constant 0 : i32
    %c0_i32_0 = arith.constant 0 : i32
    %c0_i32_1 = arith.constant 0 : i32
    return %c0_i32, %c0_i32_0 : i32, i32
  }
  func.func @transform_5(%arg0: i32) -> (i32, i32) {
    %c0_i32 = arith.constant 0 : i32
    %c0_i32_0 = arith.constant 0 : i32
    %c0_i32_1 = arith.constant 0 : i32
    return %c0_i32, %c0_i32_0 : i32, i32
  }
  func.func @transform_6(%arg0: i32) -> (i32, i32) {
    %c0_i32 = arith.constant 0 : i32
    %c0_i32_0 = arith.constant 0 : i32
    %c0_i32_1 = arith.constant 0 : i32
    return %c0_i32, %c0_i32_0 : i32, i32
  }
  func.func @transform_7(%arg0: i32) -> (i32, i32) {
    %c0_i32 = arith.constant 0 : i32
    %c0_i32_0 = arith.constant 0 : i32
    %c0_i32_1 = arith.constant 0 : i32
    return %c0_i32, %c0_i32_0 : i32, i32
  }
  func.func @transform_8(%arg0: i32) -> (i32, i32) {
    %c0_i32 = arith.constant 0 : i32
    %c0_i32_0 = arith.constant 0 : i32
    %c0_i32_1 = arith.constant 0 : i32
    return %c0_i32, %c0_i32_0 : i32, i32
  }
  func.func @transform_9(%arg0: i32) -> (i32, i32) {
    %c0_i32 = arith.constant 0 : i32
    %c0_i32_0 = arith.constant 0 : i32
    %c0_i32_1 = arith.constant 0 : i32
    return %c0_i32, %c0_i32_0 : i32, i32
  }
  func.func @transform_10(%arg0: i32) -> (i32, i32) {
    %c0_i32 = arith.constant 0 : i32
    %c0_i32_0 = arith.constant 0 : i32
    %c0_i32_1 = arith.constant 0 : i32
    return %c0_i32, %c0_i32_0 : i32, i32
  }
  func.func @transform_11(%arg0: i32) -> (i32, i32) {
    %c0_i32 = arith.constant 0 : i32
    %c0_i32_0 = arith.constant 0 : i32
    %c0_i32_1 = arith.constant 0 : i32
    return %c0_i32, %c0_i32_0 : i32, i32
  }
  func.func @transform_12(%arg0: i32) -> (i32, i32) {
    %c0_i32 = arith.constant 0 : i32
    %c0_i32_0 = arith.constant 0 : i32
    %c0_i32_1 = arith.constant 0 : i32
    return %c0_i32, %c0_i32_0 : i32, i32
  }
  func.func @transform_13(%arg0: i32) -> (i32, i32) {
    %c0_i32 = arith.constant 0 : i32
    %c0_i32_0 = arith.constant 0 : i32
    %c0_i32_1 = arith.constant 0 : i32
    return %c0_i32, %c0_i32_0 : i32, i32
  }
  func.func @transform_14(%arg0: i32) -> (i32, i32) {
    %c0_i32 = arith.constant 0 : i32
    %c0_i32_0 = arith.constant 0 : i32
    return %arg0, %c0_i32 : i32, i32
  }
}

</mosaic_0001>

<llo_original>
// kernel: encoder_layer.2
$region0: #{encoder_layer.2}
  #allocation0 [shape = 'u32[]', space=smem, size = 0x4, offset = 0x4, fixed_abs, tag = 'smem constant byte address 0x4 - core index']
  #allocation1 [shape = 'u32[144,128]{1,0:T(1,128)}', space=vmem, size = 0x12000, scoped, tag = 'internal scratch']
  %s0 = inlined_call_operand.vmem [shape: f32[8,32], index: 0, kind: input, shape index: {}]
  %s1 = inlined_call_operand.hbm [shape: f32[32,32], index: 1, kind: input, shape index: {}]
  %s2 = inlined_call_operand.vmem [shape: f32[1,32], index: 2, kind: input, shape index: {}]
  %s3 = inlined_call_operand.hbm [shape: f32[32,32], index: 3, kind: input, shape index: {}]
  %s4 = inlined_call_operand.vmem [shape: f32[1,32], index: 4, kind: input, shape index: {}]
  %s5 = inlined_call_operand.hbm [shape: f32[32,64], index: 5, kind: input, shape index: {}]
  %s6 = inlined_call_operand.vmem [shape: f32[1,64], index: 6, kind: input, shape index: {}]
  %s7 = inlined_call_operand.vmem [shape: f32[8,32], index: 7, kind: output, shape index: {0}]
  %s8 = inlined_call_operand.vmem [shape: f32[8,32], index: 8, kind: output, shape index: {1}]
  %s9 = inlined_call_operand.vmem [shape: f32[8,64], index: 9, kind: output, shape index: {2}]
  %10 = xla_tuple %s7, %s8, %s9
  %s11 = sld [smem:[#allocation0]]
  $region66: #{encoder_layer.2} parent=0
    _
  %s13 = ssub.s32 1, %s11
  %s14 = scalar_select 0, %s13, %s11
  $region1: #{encoder_layer.2} parent=0
    #allocation2 [shape = 'u8[16384]{0}', space=vmem, size = 0x4000, scoped, tag = 'input window, operand 1, single buffered']
    #allocation3 [shape = 's32[1]{0}', space=sflag, size = 0x4, scoped, tag = 'scoped memory for encoder_layer.2']
    #allocation4 [shape = 'u8[16384]{0}', space=vmem, size = 0x4000, scoped, tag = 'input window, operand 3, single buffered']
    #allocation5 [shape = 's32[1]{0}', space=sflag, size = 0x4, scoped, tag = 'scoped memory for encoder_layer.2']
    #allocation6 [shape = 'u8[16384]{0}', space=vmem, size = 0x4000, scoped, tag = 'input window, operand 5, single buffered']
    %15 = vsyncpa [#allocation3], 0
    %16 = vsyncpa [#allocation5], 0
    // Predicated region
    $region2: #{encoder_layer.2} parent=1 // pred_check
      _
    $region3: #{encoder_layer.2} parent=1 // pred_check_branch
      %18 = sbr.rel (0) target = $region5
    $region4: #{encoder_layer.2} parent=1 // pred_region
      _
    $region5: #{encoder_layer.2} parent=1 // pred_fallthru
      _
    // Predicated region
    $region6: #{encoder_layer.2} parent=1 // pred_check
      _
    $region7: #{encoder_layer.2} parent=1 // pred_check_branch
      %20 = sbr.rel (0) target = $region9
    $region8: #{encoder_layer.2} parent=1 // pred_region
      %s22 = ssub.s32 512, 512
      %23 = vsyncadd [#allocation3], %s22
      %s24 = sshll.u32 [#allocation2], 4
      %s25 = int_to_ptr.vmem [resolvable:$true] %s24
      %30 = dma.hbm_to_vmem [thread:$0]  %s1, 512, %s25, [#allocation3], 128, 128, 8
    $region9: #{encoder_layer.2} parent=1 // pred_fallthru
      _
    // Predicated region
    $region10: #{encoder_layer.2} parent=1 // pred_check
      _
    $region11: #{encoder_layer.2} parent=1 // pred_check_branch
      %32 = sbr.rel (0) target = $region13
    $region12: #{encoder_layer.2} parent=1 // pred_region
      _
    $region13: #{encoder_layer.2} parent=1 // pred_fallthru
      _
    // Predicated region
    $region14: #{encoder_layer.2} parent=1 // pred_check
      _
    $region15: #{encoder_layer.2} parent=1 // pred_check_branch
      %34 = sbr.rel (0) target = $region17
    $region16: #{encoder_layer.2} parent=1 // pred_region
      %s36 = ssub.s32 512, 512
      %37 = vsyncadd [#allocation5], %s36
      %s38 = sshll.u32 [#allocation4], 4
      %s39 = int_to_ptr.vmem [resolvable:$true] %s38
      %44 = dma.hbm_to_vmem [thread:$0]  %s3, 512, %s39, [#allocation5], 128, 128, 8
    $region17: #{encoder_layer.2} parent=1 // pred_fallthru
      _
    // Predicated region
    $region18: #{encoder_layer.2} parent=1 // pred_check
      _
    $region19: #{encoder_layer.2} parent=1 // pred_check_branch
      %46 = sbr.rel (0) target = $region21
    $region20: #{encoder_layer.2} parent=1 // pred_region
      _
    $region21: #{encoder_layer.2} parent=1 // pred_fallthru
      _
    // Predicated region
    $region22: #{encoder_layer.2} parent=1 // pred_check
      _
    $region23: #{encoder_layer.2} parent=1 // pred_check_branch
      %48 = sbr.rel (0) target = $region25
    $region24: #{encoder_layer.2} parent=1 // pred_region
      %s50 = ssub.s32 512, 512
      %51 = vsyncadd [#allocation5], %s50
      %s52 = sshll.u32 [#allocation6], 4
      %s53 = int_to_ptr.vmem [resolvable:$true] %s52
      %58 = dma.hbm_to_vmem [thread:$0]  %s5, 512, %s53, [#allocation5], 128, 128, 8
    $region25: #{encoder_layer.2} parent=1 // pred_fallthru
      _
    // Predicated region
    $region26: #{encoder_layer.2} parent=1 // pred_check
      _
    $region27: #{encoder_layer.2} parent=1 // pred_check_branch
      %60 = sbr.rel (0) target = $region29
    $region28: #{encoder_layer.2} parent=1 // pred_region
      _
    $region29: #{encoder_layer.2} parent=1 // pred_fallthru
      _
    // Predicated region
    $region30: #{encoder_layer.2} parent=1 // pred_check
      _
    $region31: #{encoder_layer.2} parent=1 // pred_check_branch
      %62 = sbr.rel (0) target = $region33
    $region32: #{encoder_layer.2} parent=1 // pred_region
      %63 = dma.done [#allocation3], 512
    $region33: #{encoder_layer.2} parent=1 // pred_fallthru
      _
    // Predicated region
    $region34: #{encoder_layer.2} parent=1 // pred_check
      _
    $region35: #{encoder_layer.2} parent=1 // pred_check_branch
      %65 = sbr.rel (0) target = $region37
    $region36: #{encoder_layer.2} parent=1 // pred_region
      %66 = dma.done [#allocation5], 512
    $region37: #{encoder_layer.2} parent=1 // pred_fallthru
      _
    // Predicated region
    $region38: #{encoder_layer.2} parent=1 // pred_check
      _
    $region39: #{encoder_layer.2} parent=1 // pred_check_branch
      %68 = sbr.rel (0) target = $region41
    $region40: #{encoder_layer.2} parent=1 // pred_region
      %69 = dma.done [#allocation5], 512
    $region41: #{encoder_layer.2} parent=1 // pred_fallthru
      _
    %v70 = vld [vmem:[%s0] sm:$0xff]
    %v71 = vld [vmem:[#allocation2] sm:$0xff]
    %v72 = vld [vmem:[#allocation2 + $0x8] sm:$0xff]
    %v73 = vld [vmem:[#allocation2 + $0x10] sm:$0xff]
    %v74 = vld [vmem:[#allocation2 + $0x18] sm:$0xff]
    %v75 = vld [vmem:[%s2] sm:$0x1]
    %v77 = vlaneseq
    %v78 = vshrl.u32 %v77, 7
    %v79 = vsub.s32 0, %v78
    %v80 = vrot.slane %v75, %v79
    %vm82 = vcmask 261120
    %v84 = vsel %vm82, %v70, 0
    %86 = vmatprep.subr.mxu0 0.0
    %87 = vmatpush1.msra.mxu0 %v71
    %88 = vmatprep.subr.mxu0 0.0
    %89 = vmatpush1.msra.mxu0 %v72
    %90 = vmatprep.subr.mxu0 0.0
    %91 = vmatpush1.msra.mxu0 %v73
    %92 = vmatprep.subr.mxu0 0.0
    %93 = vmatpush1.msra.mxu0 %v74
    %94 = vmatprep.subr.mxu0 0.0
    %95 = vmatpush1.msra.mxu0 0.0
    %96 = vmatprep.subr.mxu0 0.0
    %97 = vmatpush1.msra.mxu0 0.0
    %98 = vmatprep.subr.mxu0 0.0
    %99 = vmatpush1.msra.mxu0 0.0
    %100 = vmatprep.subr.mxu0 0.0
    %101 = vmatpush1.msra.mxu0 0.0
    %102 = vmatprep.subr.mxu0 0.0
    %103 = vmatpush1.msra.mxu0 0.0
    %104 = vmatprep.subr.mxu0 0.0
    %105 = vmatpush1.msra.mxu0 0.0
    %106 = vmatprep.subr.mxu0 0.0
    %107 = vmatpush1.msra.mxu0 0.0
    %108 = vmatprep.subr.mxu0 0.0
    %109 = vmatpush1.msra.mxu0 0.0
    %110 = vmatprep.subr.mxu0 0.0
    %111 = vmatpush1.msra.mxu0 0.0
    %112 = vmatprep.subr.mxu0 0.0
    %113 = vmatpush1.msra.mxu0 0.0
    %114 = vmatprep.subr.mxu0 0.0
    %115 = vmatpush1.msra.mxu0 0.0
    %116 = vmatprep.subr.mxu0 0.0
    %117 = vmatpush1.msra.mxu0 0.0
    %118 = vmatprep.subr.mxu0 0.0
    %119 = vmatpush1.msra.mxu0 0.0
    %120 = vmatprep.subr.mxu0 0.0
    %121 = vmatpush1.msra.mxu0 0.0
    %122 = vmatprep.subr.mxu0 0.0
    %123 = vmatpush1.msra.mxu0 0.0
    %124 = vmatprep.subr.mxu0 0.0
    %125 = vmatpush1.msra.mxu0 0.0
    %126 = vmatprep.subr.mxu0 0.0
    %127 = vmatpush1.msra.mxu0 0.0
    %128 = vmatprep.subr.mxu0 0.0
    %129 = vmatpush1.msra.mxu0 0.0
    %130 = vmatprep.subr.mxu0 0.0
    %131 = vmatpush1.msra.mxu0 0.0
    %132 = vmatprep.subr.mxu0 0.0
    %133 = vmatpush1.msra.mxu0 0.0
    %134 = vmatprep.subr.mxu0 0.0
    %135 = vmatpush1.msra.mxu0 0.0
    %136 = vmatprep.subr.mxu0 0.0
    %137 = vmatpush1.msra.mxu0 0.0
    %138 = vmatprep.subr.mxu0 0.0
    %139 = vmatpush1.msra.mxu0 0.0
    %140 = vmatprep.subr.mxu0 0.0
    %141 = vmatpush1.msra.mxu0 0.0
    %142 = vmatprep.subr.mxu0 0.0
    %143 = vmatpush1.msra.mxu0 0.0
    %144 = vmatprep.subr.mxu0 0.0
    %145 = vmatpush1.msra.mxu0 0.0
    %146 = vmatprep.subr.mxu0 0.0
    %147 = vmatpush1.msra.mxu0 0.0
    %148 = vmatprep.subr.mxu0 0.0
    %149 = vmatpush1.msra.mxu0 0.0
    %150 = vmatprep.mubr.f32.mxu0 0.0
    %151 = vmatmul.mubr.f32.gmra.mrb[0].mxu0 %v84
    %v152 = vpop.f32.mrb[0].mxu0
    %v153 = vadd.f32 %v80, %v152
    %v154 = vpop.f32.mrb[0].mxu0
    %155 = vdwg.mxu0
    %156 = vst.msk [vmem:[%s7] sm:$0xff] %vm82, %v153
    %v157 = vld [vmem:[#allocation4] sm:$0xff]
    %v158 = vld [vmem:[#allocation4 + $0x8] sm:$0xff]
    %v159 = vld [vmem:[#allocation4 + $0x10] sm:$0xff]
    %v160 = vld [vmem:[#allocation4 + $0x18] sm:$0xff]
    %v161 = vld [vmem:[%s4] sm:$0x1]
    %v163 = vlaneseq
    %v164 = vshrl.u32 %v163, 7
    %v165 = vsub.s32 0, %v164
    %v166 = vrot.slane %v161, %v165
    %168 = vmatprep.subr.mxu0 0.0
    %169 = vmatpush1.msra.mxu0 %v157
    %170 = vmatprep.subr.mxu0 0.0
    %171 = vmatpush1.msra.mxu0 %v158
    %172 = vmatprep.subr.mxu0 0.0
    %173 = vmatpush1.msra.mxu0 %v159
    %174 = vmatprep.subr.mxu0 0.0
    %175 = vmatpush1.msra.mxu0 %v160
    %176 = vmatprep.subr.mxu0 0.0
    %177 = vmatpush1.msra.mxu0 0.0
    %178 = vmatprep.subr.mxu0 0.0
    %179 = vmatpush1.msra.mxu0 0.0
    %180 = vmatprep.subr.mxu0 0.0
    %181 = vmatpush1.msra.mxu0 0.0
    %182 = vmatprep.subr.mxu0 0.0
    %183 = vmatpush1.msra.mxu0 0.0
    %184 = vmatprep.subr.mxu0 0.0
    %185 = vmatpush1.msra.mxu0 0.0
    %186 = vmatprep.subr.mxu0 0.0
    %187 = vmatpush1.msra.mxu0 0.0
    %188 = vmatprep.subr.mxu0 0.0
    %189 = vmatpush1.msra.mxu0 0.0
    %190 = vmatprep.subr.mxu0 0.0
    %191 = vmatpush1.msra.mxu0 0.0
    %192 = vmatprep.subr.mxu0 0.0
    %193 = vmatpush1.msra.mxu0 0.0
    %194 = vmatprep.subr.mxu0 0.0
    %195 = vmatpush1.msra.mxu0 0.0
    %196 = vmatprep.subr.mxu0 0.0
    %197 = vmatpush1.msra.mxu0 0.0
    %198 = vmatprep.subr.mxu0 0.0
    %199 = vmatpush1.msra.mxu0 0.0
    %200 = vmatprep.subr.mxu0 0.0
    %201 = vmatpush1.msra.mxu0 0.0
    %202 = vmatprep.subr.mxu0 0.0
    %203 = vmatpush1.msra.mxu0 0.0
    %204 = vmatprep.subr.mxu0 0.0
    %205 = vmatpush1.msra.mxu0 0.0
    %206 = vmatprep.subr.mxu0 0.0
    %207 = vmatpush1.msra.mxu0 0.0
    %208 = vmatprep.subr.mxu0 0.0
    %209 = vmatpush1.msra.mxu0 0.0
    %210 = vmatprep.subr.mxu0 0.0
    %211 = vmatpush1.msra.mxu0 0.0
    %212 = vmatprep.subr.mxu0 0.0
    %213 = vmatpush1.msra.mxu0 0.0
    %214 = vmatprep.subr.mxu0 0.0
    %215 = vmatpush1.msra.mxu0 0.0
    %216 = vmatprep.subr.mxu0 0.0
    %217 = vmatpush1.msra.mxu0 0.0
    %218 = vmatprep.subr.mxu0 0.0
    %219 = vmatpush1.msra.mxu0 0.0
    %220 = vmatprep.subr.mxu0 0.0
    %221 = vmatpush1.msra.mxu0 0.0
    %222 = vmatprep.subr.mxu0 0.0
    %223 = vmatpush1.msra.mxu0 0.0
    %224 = vmatprep.subr.mxu0 0.0
    %225 = vmatpush1.msra.mxu0 0.0
    %226 = vmatprep.subr.mxu0 0.0
    %227 = vmatpush1.msra.mxu0 0.0
    %228 = vmatprep.subr.mxu0 0.0
    %229 = vmatpush1.msra.mxu0 0.0
    %230 = vmatprep.subr.mxu0 0.0
    %231 = vmatpush1.msra.mxu0 0.0
    %232 = vmatprep.mubr.f32.mxu0 0.0
    %233 = vmatmul.mubr.f32.gmra.mrb[0].mxu0 %v84
    %v234 = vpop.f32.mrb[0].mxu0
    %v235 = vadd.f32 %v166, %v234
    %v236 = vpop.f32.mrb[0].mxu0
    %237 = vdwg.mxu0
    %238 = vst.msk [vmem:[%s8] sm:$0xff] %vm82, %v235
    %v239 = vld [vmem:[#allocation6] sm:$0xff]
    %v240 = vld [vmem:[#allocation6 + $0x8] sm:$0xff]
    %v241 = vld [vmem:[#allocation6 + $0x10] sm:$0xff]
    %v242 = vld [vmem:[#allocation6 + $0x18] sm:$0xff]
    %v243 = vld [vmem:[%s6] sm:$0x1]
    %v245 = vlaneseq
    %v246 = vshrl.u32 %v245, 7
    %v247 = vsub.s32 0, %v246
    %v248 = vrot.slane %v243, %v247
    %250 = vmatprep.subr.mxu0 0.0
    %251 = vmatpush1.msra.mxu0 %v239
    %252 = vmatprep.subr.mxu0 0.0
    %253 = vmatpush1.msra.mxu0 %v240
    %254 = vmatprep.subr.mxu0 0.0
    %255 = vmatpush1.msra.mxu0 %v241
    %256 = vmatprep.subr.mxu0 0.0
    %257 = vmatpush1.msra.mxu0 %v242
    %258 = vmatprep.subr.mxu0 0.0
    %259 = vmatpush1.msra.mxu0 0.0
    %260 = vmatprep.subr.mxu0 0.0
    %261 = vmatpush1.msra.mxu0 0.0
    %262 = vmatprep.subr.mxu0 0.0
    %263 = vmatpush1.msra.mxu0 0.0
    %264 = vmatprep.subr.mxu0 0.0
    %265 = vmatpush1.msra.mxu0 0.0
    %266 = vmatprep.subr.mxu0 0.0
    %267 = vmatpush1.msra.mxu0 0.0
    %268 = vmatprep.subr.mxu0 0.0
    %269 = vmatpush1.msra.mxu0 0.0
    %270 = vmatprep.subr.mxu0 0.0
    %271 = vmatpush1.msra.mxu0 0.0
    %272 = vmatprep.subr.mxu0 0.0
    %273 = vmatpush1.msra.mxu0 0.0
    %274 = vmatprep.subr.mxu0 0.0
    %275 = vmatpush1.msra.mxu0 0.0
    %276 = vmatprep.subr.mxu0 0.0
    %277 = vmatpush1.msra.mxu0 0.0
    %278 = vmatprep.subr.mxu0 0.0
    %279 = vmatpush1.msra.mxu0 0.0
    %280 = vmatprep.subr.mxu0 0.0
    %281 = vmatpush1.msra.mxu0 0.0
    %282 = vmatprep.subr.mxu0 0.0
    %283 = vmatpush1.msra.mxu0 0.0
    %284 = vmatprep.subr.mxu0 0.0
    %285 = vmatpush1.msra.mxu0 0.0
    %286 = vmatprep.subr.mxu0 0.0
    %287 = vmatpush1.msra.mxu0 0.0
    %288 = vmatprep.subr.mxu0 0.0
    %289 = vmatpush1.msra.mxu0 0.0
    %290 = vmatprep.subr.mxu0 0.0
    %291 = vmatpush1.msra.mxu0 0.0
    %292 = vmatprep.subr.mxu0 0.0
    %293 = vmatpush1.msra.mxu0 0.0
    %294 = vmatprep.subr.mxu0 0.0
    %295 = vmatpush1.msra.mxu0 0.0
    %296 = vmatprep.subr.mxu0 0.0
    %297 = vmatpush1.msra.mxu0 0.0
    %298 = vmatprep.subr.mxu0 0.0
    %299 = vmatpush1.msra.mxu0 0.0
    %300 = vmatprep.subr.mxu0 0.0
    %301 = vmatpush1.msra.mxu0 0.0
    %302 = vmatprep.subr.mxu0 0.0
    %303 = vmatpush1.msra.mxu0 0.0
    %304 = vmatprep.subr.mxu0 0.0
    %305 = vmatpush1.msra.mxu0 0.0
    %306 = vmatprep.subr.mxu0 0.0
    %307 = vmatpush1.msra.mxu0 0.0
    %308 = vmatprep.subr.mxu0 0.0
    %309 = vmatpush1.msra.mxu0 0.0
    %310 = vmatprep.subr.mxu0 0.0
    %311 = vmatpush1.msra.mxu0 0.0
    %312 = vmatprep.subr.mxu0 0.0
    %313 = vmatpush1.msra.mxu0 0.0
    %314 = vmatprep.mubr.f32.mxu0 0.0
    %315 = vmatmul.mubr.f32.gmra.mrb[0].mxu0 %v84
    %v316 = vpop.f32.mrb[0].mxu0
    %v317 = vadd.f32 %v248, %v316
    %v318 = vpop.f32.mrb[0].mxu0
    %319 = vdwg.mxu0
    %vm320 = vcmask 523264
    %321 = vst.msk [vmem:[%s9] sm:$0xff] %vm320, %v317
    // Predicated region
    $region42: #{encoder_layer.2} parent=1 // pred_check
      _
    $region43: #{encoder_layer.2} parent=1 // pred_check_branch
      %323 = sbr.rel (0) target = $region45
    $region44: #{encoder_layer.2} parent=1 // pred_region
      _
    $region45: #{encoder_layer.2} parent=1 // pred_fallthru
      _
    // Predicated region
    $region46: #{encoder_layer.2} parent=1 // pred_check
      _
    $region47: #{encoder_layer.2} parent=1 // pred_check_branch
      %325 = sbr.rel (0) target = $region49
    $region48: #{encoder_layer.2} parent=1 // pred_region
      _
    $region49: #{encoder_layer.2} parent=1 // pred_fallthru
      _
    // Predicated region
    $region50: #{encoder_layer.2} parent=1 // pred_check
      _
    $region51: #{encoder_layer.2} parent=1 // pred_check_branch
      %327 = sbr.rel (0) target = $region53
    $region52: #{encoder_layer.2} parent=1 // pred_region
      _
    $region53: #{encoder_layer.2} parent=1 // pred_fallthru
      _
    // Predicated region
    $region54: #{encoder_layer.2} parent=1 // pred_check
      _
    $region55: #{encoder_layer.2} parent=1 // pred_check_branch
      %329 = sbr.rel (0) target = $region57
    $region56: #{encoder_layer.2} parent=1 // pred_region
      _
    $region57: #{encoder_layer.2} parent=1 // pred_fallthru
      _
    // Predicated region
    $region58: #{encoder_layer.2} parent=1 // pred_check
      _
    $region59: #{encoder_layer.2} parent=1 // pred_check_branch
      %331 = sbr.rel (0) target = $region61
    $region60: #{encoder_layer.2} parent=1 // pred_region
      _
    $region61: #{encoder_layer.2} parent=1 // pred_fallthru
      _
    // Predicated region
    $region62: #{encoder_layer.2} parent=1 // pred_check
      _
    $region63: #{encoder_layer.2} parent=1 // pred_check_branch
      %333 = sbr.rel (0) target = $region65
    $region64: #{encoder_layer.2} parent=1 // pred_region
      _
    $region65: #{encoder_layer.2} parent=1 // pred_fallthru
      _
    %334 = vsyncpa [#allocation3], 1
    %335 = vsyncpa [#allocation5], 1

// kernel: encoder_layer.3
$region0: #{encoder_layer.3}
  #allocation0 [shape = 'u32[]', space=smem, size = 0x4, offset = 0x4, fixed_abs, tag = 'smem constant byte address 0x4 - core index']
  #allocation1 [shape = 'u32[144,128]{1,0:T(1,128)}', space=vmem, size = 0x12000, scoped, tag = 'internal scratch']
  %s0 = inlined_call_operand.vmem [shape: f32[4,8,8], index: 0, kind: input, shape index: {}]
  %s1 = inlined_call_operand.vmem [shape: f32[4,8,8], index: 1, kind: input, shape index: {}]
  %s2 = inlined_call_operand.vmem [shape: f32[4,8,16], index: 2, kind: input, shape index: {}]
  %s3 = inlined_call_operand.vmem [shape: f32[8,32], index: 3, kind: input, shape index: {}]
  %s4 = inlined_call_operand.vmem [shape: f32[64,32], index: 4, kind: input, shape index: {}]
  %s5 = inlined_call_operand.vmem [shape: f32[1,32], index: 5, kind: input, shape index: {}]
  %s6 = inlined_call_operand.vmem [shape: f32[1,32], index: 6, kind: input, shape index: {}]
  %s7 = inlined_call_operand.vmem [shape: f32[1,32], index: 7, kind: input, shape index: {}]
  %s8 = inlined_call_operand.vmem [shape: f32[32,64], index: 8, kind: input, shape index: {}]
  %s9 = inlined_call_operand.vmem [shape: f32[1,64], index: 9, kind: input, shape index: {}]
  %s10 = inlined_call_operand.vmem [shape: f32[64,32], index: 10, kind: input, shape index: {}]
  %s11 = inlined_call_operand.vmem [shape: f32[1,32], index: 11, kind: input, shape index: {}]
  %s12 = inlined_call_operand.vmem [shape: f32[1,32], index: 12, kind: input, shape index: {}]
  %s13 = inlined_call_operand.vmem [shape: f32[1,32], index: 13, kind: input, shape index: {}]
  %s14 = inlined_call_operand.hbm [shape: f32[8,32], index: 14, kind: output, shape index: {}]
  %s15 = sld [smem:[#allocation0]]
  $region66: #{encoder_layer.3} parent=0
    _
  %s17 = ssub.s32 1, %s15
  %s18 = scalar_select 0, %s17, %s15
  $region1: #{encoder_layer.3} parent=0
    #allocation2 [shape = 'u8[4096]{0}', space=vmem, size = 0x1000, scoped, tag = 'output window, operand 0, single buffered']
    #allocation3 [shape = 's32[1]{0}', space=sflag, size = 0x4, scoped, tag = 'scoped memory for encoder_layer.3']
    %19 = vsyncpa [#allocation3], 0
    // Predicated region
    $region2: #{encoder_layer.3} parent=1 // pred_check
      _
    $region3: #{encoder_layer.3} parent=1 // pred_check_branch
      %21 = sbr.rel (0) target = $region5
    $region4: #{encoder_layer.3} parent=1 // pred_region
      _
    $region5: #{encoder_layer.3} parent=1 // pred_fallthru
      _
    // Predicated region
    $region6: #{encoder_layer.3} parent=1 // pred_check
      _
    $region7: #{encoder_layer.3} parent=1 // pred_check_branch
      %23 = sbr.rel (0) target = $region9
    $region8: #{encoder_layer.3} parent=1 // pred_region
      _
    $region9: #{encoder_layer.3} parent=1 // pred_fallthru
      _
    // Predicated region
    $region10: #{encoder_layer.3} parent=1 // pred_check
      _
    $region11: #{encoder_layer.3} parent=1 // pred_check_branch
      %25 = sbr.rel (0) target = $region13
    $region12: #{encoder_layer.3} parent=1 // pred_region
      _
    $region13: #{encoder_layer.3} parent=1 // pred_fallthru
      _
    // Predicated region
    $region14: #{encoder_layer.3} parent=1 // pred_check
      _
    $region15: #{encoder_layer.3} parent=1 // pred_check_branch
      %27 = sbr.rel (0) target = $region17
    $region16: #{encoder_layer.3} parent=1 // pred_region
      _
    $region17: #{encoder_layer.3} parent=1 // pred_fallthru
      _
    // Predicated region
    $region18: #{encoder_layer.3} parent=1 // pred_check
      _
    $region19: #{encoder_layer.3} parent=1 // pred_check_branch
      %29 = sbr.rel (0) target = $region21
    $region20: #{encoder_layer.3} parent=1 // pred_region
      _
    $region21: #{encoder_layer.3} parent=1 // pred_fallthru
      _
    // Predicated region
    $region22: #{encoder_layer.3} parent=1 // pred_check
      _
    $region23: #{encoder_layer.3} parent=1 // pred_check_branch
      %31 = sbr.rel (0) target = $region25
    $region24: #{encoder_layer.3} parent=1 // pred_region
      _
    $region25: #{encoder_layer.3} parent=1 // pred_fallthru
      _
    // Predicated region
    $region26: #{encoder_layer.3} parent=1 // pred_check
      _
    $region27: #{encoder_layer.3} parent=1 // pred_check_branch
      %33 = sbr.rel (0) target = $region29
    $region28: #{encoder_layer.3} parent=1 // pred_region
      _
    $region29: #{encoder_layer.3} parent=1 // pred_fallthru
      _
    // Predicated region
    $region30: #{encoder_layer.3} parent=1 // pred_check
      _
    $region31: #{encoder_layer.3} parent=1 // pred_check_branch
      %35 = sbr.rel (0) target = $region33
    $region32: #{encoder_layer.3} parent=1 // pred_region
      _
    $region33: #{encoder_layer.3} parent=1 // pred_fallthru
      _
    // Predicated region
    $region34: #{encoder_layer.3} parent=1 // pred_check
      _
    $region35: #{encoder_layer.3} parent=1 // pred_check_branch
      %37 = sbr.rel (0) target = $region37
    $region36: #{encoder_layer.3} parent=1 // pred_region
      _
    $region37: #{encoder_layer.3} parent=1 // pred_fallthru
      _
    // Predicated region
    $region38: #{encoder_layer.3} parent=1 // pred_check
      _
    $region39: #{encoder_layer.3} parent=1 // pred_check_branch
      %39 = sbr.rel (0) target = $region41
    $region40: #{encoder_layer.3} parent=1 // pred_region
      _
    $region41: #{encoder_layer.3} parent=1 // pred_fallthru
      _
    // Predicated region
    $region42: #{encoder_layer.3} parent=1 // pred_check
      _
    $region43: #{encoder_layer.3} parent=1 // pred_check_branch
      %41 = sbr.rel (0) target = $region45
    $region44: #{encoder_layer.3} parent=1 // pred_region
      _
    $region45: #{encoder_layer.3} parent=1 // pred_fallthru
      _
    // Predicated region
    $region46: #{encoder_layer.3} parent=1 // pred_check
      _
    $region47: #{encoder_layer.3} parent=1 // pred_check_branch
      %43 = sbr.rel (0) target = $region49
    $region48: #{encoder_layer.3} parent=1 // pred_region
      _
    $region49: #{encoder_layer.3} parent=1 // pred_fallthru
      _
    // Predicated region
    $region50: #{encoder_layer.3} parent=1 // pred_check
      _
    $region51: #{encoder_layer.3} parent=1 // pred_check_branch
      %45 = sbr.rel (0) target = $region53
    $region52: #{encoder_layer.3} parent=1 // pred_region
      _
    $region53: #{encoder_layer.3} parent=1 // pred_fallthru
      _
    // Predicated region
    $region54: #{encoder_layer.3} parent=1 // pred_check
      _
    $region55: #{encoder_layer.3} parent=1 // pred_check_branch
      %47 = sbr.rel (0) target = $region57
    $region56: #{encoder_layer.3} parent=1 // pred_region
      _
    $region57: #{encoder_layer.3} parent=1 // pred_fallthru
      _
    %v48 = vld [vmem:[%s0] sm:$0xff]
    %v49 = vmul.f32 %v48, 0.35355338
    %v50 = vld [vmem:[%s1] sm:$0xff]
    %51 = vxpose.xlu0.b32.start [1/16] %v49, 128
    %52 = vxpose.xlu0.b32.cont [2/16] 0.0, 128
    %53 = vxpose.xlu0.b32.cont [3/16] 0.0, 128
    %54 = vxpose.xlu0.b32.cont [4/16] 0.0, 128
    %55 = vxpose.xlu0.b32.cont [5/16] 0.0, 128
    %56 = vxpose.xlu0.b32.cont [6/16] 0.0, 128
    %57 = vxpose.xlu0.b32.cont [7/16] 0.0, 128
    %58 = vxpose.xlu0.b32.cont [8/16] 0.0, 128
    %59 = vxpose.xlu0.b32.cont [9/16] 0.0, 128
    %60 = vxpose.xlu0.b32.cont [10/16] 0.0, 128
    %61 = vxpose.xlu0.b32.cont [11/16] 0.0, 128
    %62 = vxpose.xlu0.b32.cont [12/16] 0.0, 128
    %63 = vxpose.xlu0.b32.cont [13/16] 0.0, 128
    %64 = vxpose.xlu0.b32.cont [14/16] 0.0, 128
    %65 = vxpose.xlu0.b32.cont [15/16] 0.0, 128
    %66 = vxpose.xlu0.b32.end [16/16] 0.0, 128
    %v67 = vpop.trf.xlu0
    %v68 = vpop.trf.xlu0
    %v69 = vpop.trf.xlu0
    %v70 = vpop.trf.xlu0
    %v71 = vpop.trf.xlu0
    %v72 = vpop.trf.xlu0
    %v73 = vpop.trf.xlu0
    %v74 = vpop.trf.xlu0
    %v75 = vpop.trf.xlu0
    %v76 = vpop.trf.xlu0
    %v77 = vpop.trf.xlu0
    %v78 = vpop.trf.xlu0
    %v79 = vpop.trf.xlu0
    %v80 = vpop.trf.xlu0
    %v81 = vpop.trf.xlu0
    %v82 = vpop.trf.xlu0
    %vm83 = vcmask 64512
    %v85 = vsel %vm83, %v67, 0
    %87 = vmatprep.subr.mxu0 0.0
    %88 = vmatpush1.msra.mxu0 %v50
    %89 = vmatprep.subr.mxu0 0.0
    %90 = vmatpush1.msra.mxu0 0.0
    %91 = vmatprep.subr.mxu0 0.0
    %92 = vmatpush1.msra.mxu0 0.0
    %93 = vmatprep.subr.mxu0 0.0
    %94 = vmatpush1.msra.mxu0 0.0
    %95 = vmatprep.subr.mxu0 0.0
    %96 = vmatpush1.msra.mxu0 0.0
    %97 = vmatprep.subr.mxu0 0.0
    %98 = vmatpush1.msra.mxu0 0.0
    %99 = vmatprep.subr.mxu0 0.0
    %100 = vmatpush1.msra.mxu0 0.0
    %101 = vmatprep.subr.mxu0 0.0
    %102 = vmatpush1.msra.mxu0 0.0
    %103 = vmatprep.subr.mxu0 0.0
    %104 = vmatpush1.msra.mxu0 0.0
    %105 = vmatprep.subr.mxu0 0.0
    %106 = vmatpush1.msra.mxu0 0.0
    %107 = vmatprep.subr.mxu0 0.0
    %108 = vmatpush1.msra.mxu0 0.0
    %109 = vmatprep.subr.mxu0 0.0
    %110 = vmatpush1.msra.mxu0 0.0
    %111 = vmatprep.subr.mxu0 0.0
    %112 = vmatpush1.msra.mxu0 0.0
    %113 = vmatprep.subr.mxu0 0.0
    %114 = vmatpush1.msra.mxu0 0.0
    %115 = vmatprep.subr.mxu0 0.0
    %116 = vmatpush1.msra.mxu0 0.0
    %117 = vmatprep.subr.mxu0 0.0
    %118 = vmatpush1.msra.mxu0 0.0
    %119 = vmatprep.subr.mxu0 0.0
    %120 = vmatpush1.msra.mxu0 0.0
    %121 = vmatprep.subr.mxu0 0.0
    %122 = vmatpush1.msra.mxu0 0.0
    %123 = vmatprep.subr.mxu0 0.0
    %124 = vmatpush1.msra.mxu0 0.0
    %125 = vmatprep.subr.mxu0 0.0
    %126 = vmatpush1.msra.mxu0 0.0
    %127 = vmatprep.subr.mxu0 0.0
    %128 = vmatpush1.msra.mxu0 0.0
    %129 = vmatprep.subr.mxu0 0.0
    %130 = vmatpush1.msra.mxu0 0.0
    %131 = vmatprep.subr.mxu0 0.0
    %132 = vmatpush1.msra.mxu0 0.0
    %133 = vmatprep.subr.mxu0 0.0
    %134 = vmatpush1.msra.mxu0 0.0
    %135 = vmatprep.subr.mxu0 0.0
    %136 = vmatpush1.msra.mxu0 0.0
    %137 = vmatprep.subr.mxu0 0.0
    %138 = vmatpush1.msra.mxu0 0.0
    %139 = vmatprep.subr.mxu0 0.0
    %140 = vmatpush1.msra.mxu0 0.0
    %141 = vmatprep.subr.mxu0 0.0
    %142 = vmatpush1.msra.mxu0 0.0
    %143 = vmatprep.subr.mxu0 0.0
    %144 = vmatpush1.msra.mxu0 0.0
    %145 = vmatprep.subr.mxu0 0.0
    %146 = vmatpush1.msra.mxu0 0.0
    %147 = vmatprep.subr.mxu0 0.0
    %148 = vmatpush1.msra.mxu0 0.0
    %149 = vmatprep.subr.mxu0 0.0
    %150 = vmatpush1.msra.mxu0 0.0
    %151 = vmatprep.mubr.f32.mxu0 0.0
    %152 = vmatmul.mubr.f32.gmra.mrb[0].mxu0 %v85
    %v153 = vpop.f32.mrb[0].mxu0
    %v154 = vadd.f32 0.0, %v153
    %v155 = vpop.f32.mrb[0].mxu0
    %156 = vdwg.mxu0
    %v157 = vsel %vm83, %v154, -inf
    %158 = vmax.xlane.f32.xlu0 %v157
    %v159 = vpop.xlane.xlu0 %158
    %v160 = vsub.f32 %v154, %v159
    %v161 = vmul.f32 %v160, 1.442695
    %v162 = vpow.pop %v161
    %v163 = vsel %vm83, %v162, 0.0
    %164 = vadd.xlane.f32.xlu0 %v163
    %v165 = vpop.xlane.xlu0 %164
    %v166 = vrcp.pop %v165
    %v167 = vmul.f32 %v162, %v166
    %v168 = vld [vmem:[%s2] sm:$0xff]
    %v170 = vsel %vm83, %v167, 0
    %172 = vmatprep.subr.mxu0 0.0
    %173 = vmatpush1.msra.mxu0 %v168
    %174 = vmatprep.subr.mxu0 0.0
    %175 = vmatpush1.msra.mxu0 0.0
    %176 = vmatprep.subr.mxu0 0.0
    %177 = vmatpush1.msra.mxu0 0.0
    %178 = vmatprep.subr.mxu0 0.0
    %179 = vmatpush1.msra.mxu0 0.0
    %180 = vmatprep.subr.mxu0 0.0
    %181 = vmatpush1.msra.mxu0 0.0
    %182 = vmatprep.subr.mxu0 0.0
    %183 = vmatpush1.msra.mxu0 0.0
    %184 = vmatprep.subr.mxu0 0.0
    %185 = vmatpush1.msra.mxu0 0.0
    %186 = vmatprep.subr.mxu0 0.0
    %187 = vmatpush1.msra.mxu0 0.0
    %188 = vmatprep.subr.mxu0 0.0
    %189 = vmatpush1.msra.mxu0 0.0
    %190 = vmatprep.subr.mxu0 0.0
    %191 = vmatpush1.msra.mxu0 0.0
    %192 = vmatprep.subr.mxu0 0.0
    %193 = vmatpush1.msra.mxu0 0.0
    %194 = vmatprep.subr.mxu0 0.0
    %195 = vmatpush1.msra.mxu0 0.0
    %196 = vmatprep.subr.mxu0 0.0
    %197 = vmatpush1.msra.mxu0 0.0
    %198 = vmatprep.subr.mxu0 0.0
    %199 = vmatpush1.msra.mxu0 0.0
    %200 = vmatprep.subr.mxu0 0.0
    %201 = vmatpush1.msra.mxu0 0.0
    %202 = vmatprep.subr.mxu0 0.0
    %203 = vmatpush1.msra.mxu0 0.0
    %204 = vmatprep.subr.mxu0 0.0
    %205 = vmatpush1.msra.mxu0 0.0
    %206 = vmatprep.subr.mxu0 0.0
    %207 = vmatpush1.msra.mxu0 0.0
    %208 = vmatprep.subr.mxu0 0.0
    %209 = vmatpush1.msra.mxu0 0.0
    %210 = vmatprep.subr.mxu0 0.0
    %211 = vmatpush1.msra.mxu0 0.0
    %212 = vmatprep.subr.mxu0 0.0
    %213 = vmatpush1.msra.mxu0 0.0
    %214 = vmatprep.subr.mxu0 0.0
    %215 = vmatpush1.msra.mxu0 0.0
    %216 = vmatprep.subr.mxu0 0.0
    %217 = vmatpush1.msra.mxu0 0.0
    %218 = vmatprep.subr.mxu0 0.0
    %219 = vmatpush1.msra.mxu0 0.0
    %220 = vmatprep.subr.mxu0 0.0
    %221 = vmatpush1.msra.mxu0 0.0
    %222 = vmatprep.subr.mxu0 0.0
    %223 = vmatpush1.msra.mxu0 0.0
    %224 = vmatprep.subr.mxu0 0.0
    %225 = vmatpush1.msra.mxu0 0.0
    %226 = vmatprep.subr.mxu0 0.0
    %227 = vmatpush1.msra.mxu0 0.0
    %228 = vmatprep.subr.mxu0 0.0
    %229 = vmatpush1.msra.mxu0 0.0
    %230 = vmatprep.subr.mxu0 0.0
    %231 = vmatpush1.msra.mxu0 0.0
    %232 = vmatprep.subr.mxu0 0.0
    %233 = vmatpush1.msra.mxu0 0.0
    %234 = vmatprep.subr.mxu0 0.0
    %235 = vmatpush1.msra.mxu0 0.0
    %236 = vmatprep.mubr.f32.mxu0 0.0
    %237 = vmatmul.mubr.f32.gmra.mrb[0].mxu0 %v170
    %v238 = vpop.f32.mrb[0].mxu0
    %v239 = vadd.f32 0.0, %v238
    %v240 = vpop.f32.mrb[0].mxu0
    %241 = vdwg.mxu0
    %s242 = scalar_lea.vmem %s0, 8
    %v243 = vld [vmem:[%s242] sm:$0xff]
    %v244 = vmul.f32 %v243, 0.35355338
    %s245 = scalar_lea.vmem %s1, 8
    %v246 = vld [vmem:[%s245] sm:$0xff]
    %247 = vxpose.xlu0.b32.start [1/16] %v244, 128
    %248 = vxpose.xlu0.b32.cont [2/16] 0.0, 128
    %249 = vxpose.xlu0.b32.cont [3/16] 0.0, 128
    %250 = vxpose.xlu0.b32.cont [4/16] 0.0, 128
    %251 = vxpose.xlu0.b32.cont [5/16] 0.0, 128
    %252 = vxpose.xlu0.b32.cont [6/16] 0.0, 128
    %253 = vxpose.xlu0.b32.cont [7/16] 0.0, 128
    %254 = vxpose.xlu0.b32.cont [8/16] 0.0, 128
    %255 = vxpose.xlu0.b32.cont [9/16] 0.0, 128
    %256 = vxpose.xlu0.b32.cont [10/16] 0.0, 128
    %257 = vxpose.xlu0.b32.cont [11/16] 0.0, 128
    %258 = vxpose.xlu0.b32.cont [12/16] 0.0, 128
    %259 = vxpose.xlu0.b32.cont [13/16] 0.0, 128
    %260 = vxpose.xlu0.b32.cont [14/16] 0.0, 128
    %261 = vxpose.xlu0.b32.cont [15/16] 0.0, 128
    %262 = vxpose.xlu0.b32.end [16/16] 0.0, 128
    %v263 = vpop.trf.xlu0
    %v264 = vpop.trf.xlu0
    %v265 = vpop.trf.xlu0
    %v266 = vpop.trf.xlu0
    %v267 = vpop.trf.xlu0
    %v268 = vpop.trf.xlu0
    %v269 = vpop.trf.xlu0
    %v270 = vpop.trf.xlu0
    %v271 = vpop.trf.xlu0
    %v272 = vpop.trf.xlu0
    %v273 = vpop.trf.xlu0
    %v274 = vpop.trf.xlu0
    %v275 = vpop.trf.xlu0
    %v276 = vpop.trf.xlu0
    %v277 = vpop.trf.xlu0
    %v278 = vpop.trf.xlu0
    %v280 = vsel %vm83, %v263, 0
    %282 = vmatprep.subr.mxu0 0.0
    %283 = vmatpush1.msra.mxu0 %v246
    %284 = vmatprep.subr.mxu0 0.0
    %285 = vmatpush1.msra.mxu0 0.0
    %286 = vmatprep.subr.mxu0 0.0
    %287 = vmatpush1.msra.mxu0 0.0
    %288 = vmatprep.subr.mxu0 0.0
    %289 = vmatpush1.msra.mxu0 0.0
    %290 = vmatprep.subr.mxu0 0.0
    %291 = vmatpush1.msra.mxu0 0.0
    %292 = vmatprep.subr.mxu0 0.0
    %293 = vmatpush1.msra.mxu0 0.0
    %294 = vmatprep.subr.mxu0 0.0
    %295 = vmatpush1.msra.mxu0 0.0
    %296 = vmatprep.subr.mxu0 0.0
    %297 = vmatpush1.msra.mxu0 0.0
    %298 = vmatprep.subr.mxu0 0.0
    %299 = vmatpush1.msra.mxu0 0.0
    %300 = vmatprep.subr.mxu0 0.0
    %301 = vmatpush1.msra.mxu0 0.0
    %302 = vmatprep.subr.mxu0 0.0
    %303 = vmatpush1.msra.mxu0 0.0
    %304 = vmatprep.subr.mxu0 0.0
    %305 = vmatpush1.msra.mxu0 0.0
    %306 = vmatprep.subr.mxu0 0.0
    %307 = vmatpush1.msra.mxu0 0.0
    %308 = vmatprep.subr.mxu0 0.0
    %309 = vmatpush1.msra.mxu0 0.0
    %310 = vmatprep.subr.mxu0 0.0
    %311 = vmatpush1.msra.mxu0 0.0
    %312 = vmatprep.subr.mxu0 0.0
    %313 = vmatpush1.msra.mxu0 0.0
    %314 = vmatprep.subr.mxu0 0.0
    %315 = vmatpush1.msra.mxu0 0.0
    %316 = vmatprep.subr.mxu0 0.0
    %317 = vmatpush1.msra.mxu0 0.0
    %318 = vmatprep.subr.mxu0 0.0
    %319 = vmatpush1.msra.mxu0 0.0
    %320 = vmatprep.subr.mxu0 0.0
    %321 = vmatpush1.msra.mxu0 0.0
    %322 = vmatprep.subr.mxu0 0.0
    %323 = vmatpush1.msra.mxu0 0.0
    %324 = vmatprep.subr.mxu0 0.0
    %325 = vmatpush1.msra.mxu0 0.0
    %326 = vmatprep.subr.mxu0 0.0
    %327 = vmatpush1.msra.mxu0 0.0
    %328 = vmatprep.subr.mxu0 0.0
    %329 = vmatpush1.msra.mxu0 0.0
    %330 = vmatprep.subr.mxu0 0.0
    %331 = vmatpush1.msra.mxu0 0.0
    %332 = vmatprep.subr.mxu0 0.0
    %333 = vmatpush1.msra.mxu0 0.0
    %334 = vmatprep.subr.mxu0 0.0
    %335 = vmatpush1.msra.mxu0 0.0
    %336 = vmatprep.subr.mxu0 0.0
    %337 = vmatpush1.msra.mxu0 0.0
    %338 = vmatprep.subr.mxu0 0.0
    %339 = vmatpush1.msra.mxu0 0.0
    %340 = vmatprep.subr.mxu0 0.0
    %341 = vmatpush1.msra.mxu0 0.0
    %342 = vmatprep.subr.mxu0 0.0
    %343 = vmatpush1.msra.mxu0 0.0
    %344 = vmatprep.subr.mxu0 0.0
    %345 = vmatpush1.msra.mxu0 0.0
    %346 = vmatprep.mubr.f32.mxu0 0.0
    %347 = vmatmul.mubr.f32.gmra.mrb[0].mxu0 %v280
    %v348 = vpop.f32.mrb[0].mxu0
    %v349 = vadd.f32 0.0, %v348
    %v350 = vpop.f32.mrb[0].mxu0
    %351 = vdwg.mxu0
    %v352 = vsel %vm83, %v349, -inf
    %353 = vmax.xlane.f32.xlu0 %v352
    %v354 = vpop.xlane.xlu0 %353
    %v355 = vsub.f32 %v349, %v354
    %v356 = vmul.f32 %v355, 1.442695
    %v357 = vpow.pop %v356
    %v358 = vsel %vm83, %v357, 0.0
    %359 = vadd.xlane.f32.xlu0 %v358
    %v360 = vpop.xlane.xlu0 %359
    %v361 = vrcp.pop %v360
    %v362 = vmul.f32 %v357, %v361
    %s363 = scalar_lea.vmem %s2, 8
    %v364 = vld [vmem:[%s363] sm:$0xff]
    %v366 = vsel %vm83, %v362, 0
    %368 = vmatprep.subr.mxu0 0.0
    %369 = vmatpush1.msra.mxu0 %v364
    %370 = vmatprep.subr.mxu0 0.0
    %371 = vmatpush1.msra.mxu0 0.0
    %372 = vmatprep.subr.mxu0 0.0
    %373 = vmatpush1.msra.mxu0 0.0
    %374 = vmatprep.subr.mxu0 0.0
    %375 = vmatpush1.msra.mxu0 0.0
    %376 = vmatprep.subr.mxu0 0.0
    %377 = vmatpush1.msra.mxu0 0.0
    %378 = vmatprep.subr.mxu0 0.0
    %379 = vmatpush1.msra.mxu0 0.0
    %380 = vmatprep.subr.mxu0 0.0
    %381 = vmatpush1.msra.mxu0 0.0
    %382 = vmatprep.subr.mxu0 0.0
    %383 = vmatpush1.msra.mxu0 0.0
    %384 = vmatprep.subr.mxu0 0.0
    %385 = vmatpush1.msra.mxu0 0.0
    %386 = vmatprep.subr.mxu0 0.0
    %387 = vmatpush1.msra.mxu0 0.0
    %388 = vmatprep.subr.mxu0 0.0
    %389 = vmatpush1.msra.mxu0 0.0
    %390 = vmatprep.subr.mxu0 0.0
    %391 = vmatpush1.msra.mxu0 0.0
    %392 = vmatprep.subr.mxu0 0.0
    %393 = vmatpush1.msra.mxu0 0.0
    %394 = vmatprep.subr.mxu0 0.0
    %395 = vmatpush1.msra.mxu0 0.0
    %396 = vmatprep.subr.mxu0 0.0
    %397 = vmatpush1.msra.mxu0 0.0
    %398 = vmatprep.subr.mxu0 0.0
    %399 = vmatpush1.msra.mxu0 0.0
    %400 = vmatprep.subr.mxu0 0.0
    %401 = vmatpush1.msra.mxu0 0.0
    %402 = vmatprep.subr.mxu0 0.0
    %403 = vmatpush1.msra.mxu0 0.0
    %404 = vmatprep.subr.mxu0 0.0
    %405 = vmatpush1.msra.mxu0 0.0
    %406 = vmatprep.subr.mxu0 0.0
    %407 = vmatpush1.msra.mxu0 0.0
    %408 = vmatprep.subr.mxu0 0.0
    %409 = vmatpush1.msra.mxu0 0.0
    %410 = vmatprep.subr.mxu0 0.0
    %411 = vmatpush1.msra.mxu0 0.0
    %412 = vmatprep.subr.mxu0 0.0
    %413 = vmatpush1.msra.mxu0 0.0
    %414 = vmatprep.subr.mxu0 0.0
    %415 = vmatpush1.msra.mxu0 0.0
    %416 = vmatprep.subr.mxu0 0.0
    %417 = vmatpush1.msra.mxu0 0.0
    %418 = vmatprep.subr.mxu0 0.0
    %419 = vmatpush1.msra.mxu0 0.0
    %420 = vmatprep.subr.mxu0 0.0
    %421 = vmatpush1.msra.mxu0 0.0
    %422 = vmatprep.subr.mxu0 0.0
    %423 = vmatpush1.msra.mxu0 0.0
    %424 = vmatprep.subr.mxu0 0.0
    %425 = vmatpush1.msra.mxu0 0.0
    %426 = vmatprep.subr.mxu0 0.0
    %427 = vmatpush1.msra.mxu0 0.0
    %428 = vmatprep.subr.mxu0 0.0
    %429 = vmatpush1.msra.mxu0 0.0
    %430 = vmatprep.subr.mxu0 0.0
    %431 = vmatpush1.msra.mxu0 0.0
    %432 = vmatprep.mubr.f32.mxu0 0.0
    %433 = vmatmul.mubr.f32.gmra.mrb[0].mxu0 %v366
    %v434 = vpop.f32.mrb[0].mxu0
    %v435 = vadd.f32 0.0, %v434
    %v436 = vpop.f32.mrb[0].mxu0
    %437 = vdwg.mxu0
    %s438 = scalar_lea.vmem %s0, 16
    %v439 = vld [vmem:[%s438] sm:$0xff]
    %v440 = vmul.f32 %v439, 0.35355338
    %s441 = scalar_lea.vmem %s1, 16
    %v442 = vld [vmem:[%s441] sm:$0xff]
    %443 = vxpose.xlu0.b32.start [1/16] %v440, 128
    %444 = vxpose.xlu0.b32.cont [2/16] 0.0, 128
    %445 = vxpose.xlu0.b32.cont [3/16] 0.0, 128
    %446 = vxpose.xlu0.b32.cont [4/16] 0.0, 128
    %447 = vxpose.xlu0.b32.cont [5/16] 0.0, 128
    %448 = vxpose.xlu0.b32.cont [6/16] 0.0, 128
    %449 = vxpose.xlu0.b32.cont [7/16] 0.0, 128
    %450 = vxpose.xlu0.b32.cont [8/16] 0.0, 128
    %451 = vxpose.xlu0.b32.cont [9/16] 0.0, 128
    %452 = vxpose.xlu0.b32.cont [10/16] 0.0, 128
    %453 = vxpose.xlu0.b32.cont [11/16] 0.0, 128
    %454 = vxpose.xlu0.b32.cont [12/16] 0.0, 128
    %455 = vxpose.xlu0.b32.cont [13/16] 0.0, 128
    %456 = vxpose.xlu0.b32.cont [14/16] 0.0, 128
    %457 = vxpose.xlu0.b32.cont [15/16] 0.0, 128
    %458 = vxpose.xlu0.b32.end [16/16] 0.0, 128
    %v459 = vpop.trf.xlu0
    %v460 = vpop.trf.xlu0
    %v461 = vpop.trf.xlu0
    %v462 = vpop.trf.xlu0
    %v463 = vpop.trf.xlu0
    %v464 = vpop.trf.xlu0
    %v465 = vpop.trf.xlu0
    %v466 = vpop.trf.xlu0
    %v467 = vpop.trf.xlu0
    %v468 = vpop.trf.xlu0
    %v469 = vpop.trf.xlu0
    %v470 = vpop.trf.xlu0
    %v471 = vpop.trf.xlu0
    %v472 = vpop.trf.xlu0
    %v473 = vpop.trf.xlu0
    %v474 = vpop.trf.xlu0
    %v476 = vsel %vm83, %v459, 0
    %478 = vmatprep.subr.mxu0 0.0
    %479 = vmatpush1.msra.mxu0 %v442
    %480 = vmatprep.subr.mxu0 0.0
    %481 = vmatpush1.msra.mxu0 0.0
    %482 = vmatprep.subr.mxu0 0.0
    %483 = vmatpush1.msra.mxu0 0.0
    %484 = vmatprep.subr.mxu0 0.0
    %485 = vmatpush1.msra.mxu0 0.0
    %486 = vmatprep.subr.mxu0 0.0
    %487 = vmatpush1.msra.mxu0 0.0
    %488 = vmatprep.subr.mxu0 0.0
    %489 = vmatpush1.msra.mxu0 0.0
    %490 = vmatprep.subr.mxu0 0.0
    %491 = vmatpush1.msra.mxu0 0.0
    %492 = vmatprep.subr.mxu0 0.0
    %493 = vmatpush1.msra.mxu0 0.0
    %494 = vmatprep.subr.mxu0 0.0
    %495 = vmatpush1.msra.mxu0 0.0
    %496 = vmatprep.subr.mxu0 0.0
    %497 = vmatpush1.msra.mxu0 0.0
    %498 = vmatprep.subr.mxu0 0.0
    %499 = vmatpush1.msra.mxu0 0.0
    %500 = vmatprep.subr.mxu0 0.0
    %501 = vmatpush1.msra.mxu0 0.0
    %502 = vmatprep.subr.mxu0 0.0
    %503 = vmatpush1.msra.mxu0 0.0
    %504 = vmatprep.subr.mxu0 0.0
    %505 = vmatpush1.msra.mxu0 0.0
    %506 = vmatprep.subr.mxu0 0.0
    %507 = vmatpush1.msra.mxu0 0.0
    %508 = vmatprep.subr.mxu0 0.0
    %509 = vmatpush1.msra.mxu0 0.0
    %510 = vmatprep.subr.mxu0 0.0
    %511 = vmatpush1.msra.mxu0 0.0
    %512 = vmatprep.subr.mxu0 0.0
    %513 = vmatpush1.msra.mxu0 0.0
    %514 = vmatprep.subr.mxu0 0.0
    %515 = vmatpush1.msra.mxu0 0.0
    %516 = vmatprep.subr.mxu0 0.0
    %517 = vmatpush1.msra.mxu0 0.0
    %518 = vmatprep.subr.mxu0 0.0
    %519 = vmatpush1.msra.mxu0 0.0
    %520 = vmatprep.subr.mxu0 0.0
    %521 = vmatpush1.msra.mxu0 0.0
    %522 = vmatprep.subr.mxu0 0.0
    %523 = vmatpush1.msra.mxu0 0.0
    %524 = vmatprep.subr.mxu0 0.0
    %525 = vmatpush1.msra.mxu0 0.0
    %526 = vmatprep.subr.mxu0 0.0
    %527 = vmatpush1.msra.mxu0 0.0
    %528 = vmatprep.subr.mxu0 0.0
    %529 = vmatpush1.msra.mxu0 0.0
    %530 = vmatprep.subr.mxu0 0.0
    %531 = vmatpush1.msra.mxu0 0.0
    %532 = vmatprep.subr.mxu0 0.0
    %533 = vmatpush1.msra.mxu0 0.0
    %534 = vmatprep.subr.mxu0 0.0
    %535 = vmatpush1.msra.mxu0 0.0
    %536 = vmatprep.subr.mxu0 0.0
    %537 = vmatpush1.msra.mxu0 0.0
    %538 = vmatprep.subr.mxu0 0.0
    %539 = vmatpush1.msra.mxu0 0.0
    %540 = vmatprep.subr.mxu0 0.0
    %541 = vmatpush1.msra.mxu0 0.0
    %542 = vmatprep.mubr.f32.mxu0 0.0
    %543 = vmatmul.mubr.f32.gmra.mrb[0].mxu0 %v476
    %v544 = vpop.f32.mrb[0].mxu0
    %v545 = vadd.f32 0.0, %v544
    %v546 = vpop.f32.mrb[0].mxu0
    %547 = vdwg.mxu0
    %v548 = vsel %vm83, %v545, -inf
    %549 = vmax.xlane.f32.xlu0 %v548
    %v550 = vpop.xlane.xlu0 %549
    %v551 = vsub.f32 %v545, %v550
    %v552 = vmul.f32 %v551, 1.442695
    %v553 = vpow.pop %v552
    %v554 = vsel %vm83, %v553, 0.0
    %555 = vadd.xlane.f32.xlu0 %v554
    %v556 = vpop.xlane.xlu0 %555
    %v557 = vrcp.pop %v556
    %v558 = vmul.f32 %v553, %v557
    %s559 = scalar_lea.vmem %s2, 16
    %v560 = vld [vmem:[%s559] sm:$0xff]
    %v562 = vsel %vm83, %v558, 0
    %564 = vmatprep.subr.mxu0 0.0
    %565 = vmatpush1.msra.mxu0 %v560
    %566 = vmatprep.subr.mxu0 0.0
    %567 = vmatpush1.msra.mxu0 0.0
    %568 = vmatprep.subr.mxu0 0.0
    %569 = vmatpush1.msra.mxu0 0.0
    %570 = vmatprep.subr.mxu0 0.0
    %571 = vmatpush1.msra.mxu0 0.0
    %572 = vmatprep.subr.mxu0 0.0
    %573 = vmatpush1.msra.mxu0 0.0
    %574 = vmatprep.subr.mxu0 0.0
    %575 = vmatpush1.msra.mxu0 0.0
    %576 = vmatprep.subr.mxu0 0.0
    %577 = vmatpush1.msra.mxu0 0.0
    %578 = vmatprep.subr.mxu0 0.0
    %579 = vmatpush1.msra.mxu0 0.0
    %580 = vmatprep.subr.mxu0 0.0
    %581 = vmatpush1.msra.mxu0 0.0
    %582 = vmatprep.subr.mxu0 0.0
    %583 = vmatpush1.msra.mxu0 0.0
    %584 = vmatprep.subr.mxu0 0.0
    %585 = vmatpush1.msra.mxu0 0.0
    %586 = vmatprep.subr.mxu0 0.0
    %587 = vmatpush1.msra.mxu0 0.0
    %588 = vmatprep.subr.mxu0 0.0
    %589 = vmatpush1.msra.mxu0 0.0
    %590 = vmatprep.subr.mxu0 0.0
    %591 = vmatpush1.msra.mxu0 0.0
    %592 = vmatprep.subr.mxu0 0.0
    %593 = vmatpush1.msra.mxu0 0.0
    %594 = vmatprep.subr.mxu0 0.0
    %595 = vmatpush1.msra.mxu0 0.0
    %596 = vmatprep.subr.mxu0 0.0
    %597 = vmatpush1.msra.mxu0 0.0
    %598 = vmatprep.subr.mxu0 0.0
    %599 = vmatpush1.msra.mxu0 0.0
    %600 = vmatprep.subr.mxu0 0.0
    %601 = vmatpush1.msra.mxu0 0.0
    %602 = vmatprep.subr.mxu0 0.0
    %603 = vmatpush1.msra.mxu0 0.0
    %604 = vmatprep.subr.mxu0 0.0
    %605 = vmatpush1.msra.mxu0 0.0
    %606 = vmatprep.subr.mxu0 0.0
    %607 = vmatpush1.msra.mxu0 0.0
    %608 = vmatprep.subr.mxu0 0.0
    %609 = vmatpush1.msra.mxu0 0.0
    %610 = vmatprep.subr.mxu0 0.0
    %611 = vmatpush1.msra.mxu0 0.0
    %612 = vmatprep.subr.mxu0 0.0
    %613 = vmatpush1.msra.mxu0 0.0
    %614 = vmatprep.subr.mxu0 0.0
    %615 = vmatpush1.msra.mxu0 0.0
    %616 = vmatprep.subr.mxu0 0.0
    %617 = vmatpush1.msra.mxu0 0.0
    %618 = vmatprep.subr.mxu0 0.0
    %619 = vmatpush1.msra.mxu0 0.0
    %620 = vmatprep.subr.mxu0 0.0
    %621 = vmatpush1.msra.mxu0 0.0
    %622 = vmatprep.subr.mxu0 0.0
    %623 = vmatpush1.msra.mxu0 0.0
    %624 = vmatprep.subr.mxu0 0.0
    %625 = vmatpush1.msra.mxu0 0.0
    %626 = vmatprep.subr.mxu0 0.0
    %627 = vmatpush1.msra.mxu0 0.0
    %628 = vmatprep.mubr.f32.mxu0 0.0
    %629 = vmatmul.mubr.f32.gmra.mrb[0].mxu0 %v562
    %v630 = vpop.f32.mrb[0].mxu0
    %v631 = vadd.f32 0.0, %v630
    %v632 = vpop.f32.mrb[0].mxu0
    %633 = vdwg.mxu0
    %s634 = scalar_lea.vmem %s0, 24
    %v635 = vld [vmem:[%s634] sm:$0xff]
    %v636 = vmul.f32 %v635, 0.35355338
    %s637 = scalar_lea.vmem %s1, 24
    %v638 = vld [vmem:[%s637] sm:$0xff]
    %639 = vxpose.xlu0.b32.start [1/16] %v636, 128
    %640 = vxpose.xlu0.b32.cont [2/16] 0.0, 128
    %641 = vxpose.xlu0.b32.cont [3/16] 0.0, 128
    %642 = vxpose.xlu0.b32.cont [4/16] 0.0, 128
    %643 = vxpose.xlu0.b32.cont [5/16] 0.0, 128
    %644 = vxpose.xlu0.b32.cont [6/16] 0.0, 128
    %645 = vxpose.xlu0.b32.cont [7/16] 0.0, 128
    %646 = vxpose.xlu0.b32.cont [8/16] 0.0, 128
    %647 = vxpose.xlu0.b32.cont [9/16] 0.0, 128
    %648 = vxpose.xlu0.b32.cont [10/16] 0.0, 128
    %649 = vxpose.xlu0.b32.cont [11/16] 0.0, 128
    %650 = vxpose.xlu0.b32.cont [12/16] 0.0, 128
    %651 = vxpose.xlu0.b32.cont [13/16] 0.0, 128
    %652 = vxpose.xlu0.b32.cont [14/16] 0.0, 128
    %653 = vxpose.xlu0.b32.cont [15/16] 0.0, 128
    %654 = vxpose.xlu0.b32.end [16/16] 0.0, 128
    %v655 = vpop.trf.xlu0
    %v656 = vpop.trf.xlu0
    %v657 = vpop.trf.xlu0
    %v658 = vpop.trf.xlu0
    %v659 = vpop.trf.xlu0
    %v660 = vpop.trf.xlu0
    %v661 = vpop.trf.xlu0
    %v662 = vpop.trf.xlu0
    %v663 = vpop.trf.xlu0
    %v664 = vpop.trf.xlu0
    %v665 = vpop.trf.xlu0
    %v666 = vpop.trf.xlu0
    %v667 = vpop.trf.xlu0
    %v668 = vpop.trf.xlu0
    %v669 = vpop.trf.xlu0
    %v670 = vpop.trf.xlu0
    %v672 = vsel %vm83, %v655, 0
    %674 = vmatprep.subr.mxu0 0.0
    %675 = vmatpush1.msra.mxu0 %v638
    %676 = vmatprep.subr.mxu0 0.0
    %677 = vmatpush1.msra.mxu0 0.0
    %678 = vmatprep.subr.mxu0 0.0
    %679 = vmatpush1.msra.mxu0 0.0
    %680 = vmatprep.subr.mxu0 0.0
    %681 = vmatpush1.msra.mxu0 0.0
    %682 = vmatprep.subr.mxu0 0.0
    %683 = vmatpush1.msra.mxu0 0.0
    %684 = vmatprep.subr.mxu0 0.0
    %685 = vmatpush1.msra.mxu0 0.0
    %686 = vmatprep.subr.mxu0 0.0
    %687 = vmatpush1.msra.mxu0 0.0
    %688 = vmatprep.subr.mxu0 0.0
    %689 = vmatpush1.msra.mxu0 0.0
    %690 = vmatprep.subr.mxu0 0.0
    %691 = vmatpush1.msra.mxu0 0.0
    %692 = vmatprep.subr.mxu0 0.0
    %693 = vmatpush1.msra.mxu0 0.0
    %694 = vmatprep.subr.mxu0 0.0
    %695 = vmatpush1.msra.mxu0 0.0
    %696 = vmatprep.subr.mxu0 0.0
    %697 = vmatpush1.msra.mxu0 0.0
    %698 = vmatprep.subr.mxu0 0.0
    %699 = vmatpush1.msra.mxu0 0.0
    %700 = vmatprep.subr.mxu0 0.0
    %701 = vmatpush1.msra.mxu0 0.0
    %702 = vmatprep.subr.mxu0 0.0
    %703 = vmatpush1.msra.mxu0 0.0
    %704 = vmatprep.subr.mxu0 0.0
    %705 = vmatpush1.msra.mxu0 0.0
    %706 = vmatprep.subr.mxu0 0.0
    %707 = vmatpush1.msra.mxu0 0.0
    %708 = vmatprep.subr.mxu0 0.0
    %709 = vmatpush1.msra.mxu0 0.0
    %710 = vmatprep.subr.mxu0 0.0
    %711 = vmatpush1.msra.mxu0 0.0
    %712 = vmatprep.subr.mxu0 0.0
    %713 = vmatpush1.msra.mxu0 0.0
    %714 = vmatprep.subr.mxu0 0.0
    %715 = vmatpush1.msra.mxu0 0.0
    %716 = vmatprep.subr.mxu0 0.0
    %717 = vmatpush1.msra.mxu0 0.0
    %718 = vmatprep.subr.mxu0 0.0
    %719 = vmatpush1.msra.mxu0 0.0
    %720 = vmatprep.subr.mxu0 0.0
    %721 = vmatpush1.msra.mxu0 0.0
    %722 = vmatprep.subr.mxu0 0.0
    %723 = vmatpush1.msra.mxu0 0.0
    %724 = vmatprep.subr.mxu0 0.0
    %725 = vmatpush1.msra.mxu0 0.0
    %726 = vmatprep.subr.mxu0 0.0
    %727 = vmatpush1.msra.mxu0 0.0
    %728 = vmatprep.subr.mxu0 0.0
    %729 = vmatpush1.msra.mxu0 0.0
    %730 = vmatprep.subr.mxu0 0.0
    %731 = vmatpush1.msra.mxu0 0.0
    %732 = vmatprep.subr.mxu0 0.0
    %733 = vmatpush1.msra.mxu0 0.0
    %734 = vmatprep.subr.mxu0 0.0
    %735 = vmatpush1.msra.mxu0 0.0
    %736 = vmatprep.subr.mxu0 0.0
    %737 = vmatpush1.msra.mxu0 0.0
    %738 = vmatprep.mubr.f32.mxu0 0.0
    %739 = vmatmul.mubr.f32.gmra.mrb[0].mxu0 %v672
    %v740 = vpop.f32.mrb[0].mxu0
    %v741 = vadd.f32 0.0, %v740
    %v742 = vpop.f32.mrb[0].mxu0
    %743 = vdwg.mxu0
    %v744 = vsel %vm83, %v741, -inf
    %745 = vmax.xlane.f32.xlu0 %v744
    %v746 = vpop.xlane.xlu0 %745
    %v747 = vsub.f32 %v741, %v746
    %v748 = vmul.f32 %v747, 1.442695
    %v749 = vpow.pop %v748
    %v750 = vsel %vm83, %v749, 0.0
    %751 = vadd.xlane.f32.xlu0 %v750
    %v752 = vpop.xlane.xlu0 %751
    %v753 = vrcp.pop %v752
    %v754 = vmul.f32 %v749, %v753
    %s755 = scalar_lea.vmem %s2, 24
    %v756 = vld [vmem:[%s755] sm:$0xff]
    %v758 = vsel %vm83, %v754, 0
    %760 = vmatprep.subr.mxu0 0.0
    %761 = vmatpush1.msra.mxu0 %v756
    %762 = vmatprep.subr.mxu0 0.0
    %763 = vmatpush1.msra.mxu0 0.0
    %764 = vmatprep.subr.mxu0 0.0
    %765 = vmatpush1.msra.mxu0 0.0
    %766 = vmatprep.subr.mxu0 0.0
    %767 = vmatpush1.msra.mxu0 0.0
    %768 = vmatprep.subr.mxu0 0.0
    %769 = vmatpush1.msra.mxu0 0.0
    %770 = vmatprep.subr.mxu0 0.0
    %771 = vmatpush1.msra.mxu0 0.0
    %772 = vmatprep.subr.mxu0 0.0
    %773 = vmatpush1.msra.mxu0 0.0
    %774 = vmatprep.subr.mxu0 0.0
    %775 = vmatpush1.msra.mxu0 0.0
    %776 = vmatprep.subr.mxu0 0.0
    %777 = vmatpush1.msra.mxu0 0.0
    %778 = vmatprep.subr.mxu0 0.0
    %779 = vmatpush1.msra.mxu0 0.0
    %780 = vmatprep.subr.mxu0 0.0
    %781 = vmatpush1.msra.mxu0 0.0
    %782 = vmatprep.subr.mxu0 0.0
    %783 = vmatpush1.msra.mxu0 0.0
    %784 = vmatprep.subr.mxu0 0.0
    %785 = vmatpush1.msra.mxu0 0.0
    %786 = vmatprep.subr.mxu0 0.0
    %787 = vmatpush1.msra.mxu0 0.0
    %788 = vmatprep.subr.mxu0 0.0
    %789 = vmatpush1.msra.mxu0 0.0
    %790 = vmatprep.subr.mxu0 0.0
    %791 = vmatpush1.msra.mxu0 0.0
    %792 = vmatprep.subr.mxu0 0.0
    %793 = vmatpush1.msra.mxu0 0.0
    %794 = vmatprep.subr.mxu0 0.0
    %795 = vmatpush1.msra.mxu0 0.0
    %796 = vmatprep.subr.mxu0 0.0
    %797 = vmatpush1.msra.mxu0 0.0
    %798 = vmatprep.subr.mxu0 0.0
    %799 = vmatpush1.msra.mxu0 0.0
    %800 = vmatprep.subr.mxu0 0.0
    %801 = vmatpush1.msra.mxu0 0.0
    %802 = vmatprep.subr.mxu0 0.0
    %803 = vmatpush1.msra.mxu0 0.0
    %804 = vmatprep.subr.mxu0 0.0
    %805 = vmatpush1.msra.mxu0 0.0
    %806 = vmatprep.subr.mxu0 0.0
    %807 = vmatpush1.msra.mxu0 0.0
    %808 = vmatprep.subr.mxu0 0.0
    %809 = vmatpush1.msra.mxu0 0.0
    %810 = vmatprep.subr.mxu0 0.0
    %811 = vmatpush1.msra.mxu0 0.0
    %812 = vmatprep.subr.mxu0 0.0
    %813 = vmatpush1.msra.mxu0 0.0
    %814 = vmatprep.subr.mxu0 0.0
    %815 = vmatpush1.msra.mxu0 0.0
    %816 = vmatprep.subr.mxu0 0.0
    %817 = vmatpush1.msra.mxu0 0.0
    %818 = vmatprep.subr.mxu0 0.0
    %819 = vmatpush1.msra.mxu0 0.0
    %820 = vmatprep.subr.mxu0 0.0
    %821 = vmatpush1.msra.mxu0 0.0
    %822 = vmatprep.subr.mxu0 0.0
    %823 = vmatpush1.msra.mxu0 0.0
    %824 = vmatprep.mubr.f32.mxu0 0.0
    %825 = vmatmul.mubr.f32.gmra.mrb[0].mxu0 %v758
    %v826 = vpop.f32.mrb[0].mxu0
    %v827 = vadd.f32 0.0, %v826
    %v828 = vpop.f32.mrb[0].mxu0
    %829 = vdwg.mxu0
    %831 = vrot.lane.b32.xlu0 %v435, 16
    %v832 = vpop.permute.xlu0 %831
    %835 = vrot.lane.b32.xlu0 %v631, 32
    %v836 = vpop.permute.xlu0 %835
    %839 = vrot.lane.b32.xlu0 %v827, 48
    %v840 = vpop.permute.xlu0 %839
    %vm842 = vcmask 130048
    %v843 = vsel %vm842, %v239, %v832
    %vm844 = vcmask 261120
    %v845 = vsel %vm844, %v843, %v836
    %vm846 = vcmask 392192
    %v847 = vsel %vm846, %v845, %v840
    %v848 = vld [vmem:[%s4] sm:$0xff]
    %v849 = vld [vmem:[%s4 + $0x8] sm:$0xff]
    %v850 = vld [vmem:[%s4 + $0x10] sm:$0xff]
    %v851 = vld [vmem:[%s4 + $0x18] sm:$0xff]
    %v852 = vld [vmem:[%s4 + $0x20] sm:$0xff]
    %v853 = vld [vmem:[%s4 + $0x28] sm:$0xff]
    %v854 = vld [vmem:[%s4 + $0x30] sm:$0xff]
    %v855 = vld [vmem:[%s4 + $0x38] sm:$0xff]
    %v856 = vld [vmem:[%s5] sm:$0x1]
    %v858 = vlaneseq
    %v859 = vshrl.u32 %v858, 7
    %v860 = vsub.s32 0, %v859
    %v861 = vrot.slane %v856, %v860
    %vm863 = vcmask 523264
    %v865 = vsel %vm863, %v847, 0
    %867 = vmatprep.subr.mxu0 0.0
    %868 = vmatpush1.msra.mxu0 %v848
    %869 = vmatprep.subr.mxu0 0.0
    %870 = vmatpush1.msra.mxu0 %v849
    %871 = vmatprep.subr.mxu0 0.0
    %872 = vmatpush1.msra.mxu0 %v850
    %873 = vmatprep.subr.mxu0 0.0
    %874 = vmatpush1.msra.mxu0 %v851
    %875 = vmatprep.subr.mxu0 0.0
    %876 = vmatpush1.msra.mxu0 %v852
    %877 = vmatprep.subr.mxu0 0.0
    %878 = vmatpush1.msra.mxu0 %v853
    %879 = vmatprep.subr.mxu0 0.0
    %880 = vmatpush1.msra.mxu0 %v854
    %881 = vmatprep.subr.mxu0 0.0
    %882 = vmatpush1.msra.mxu0 %v855
    %883 = vmatprep.subr.mxu0 0.0
    %884 = vmatpush1.msra.mxu0 0.0
    %885 = vmatprep.subr.mxu0 0.0
    %886 = vmatpush1.msra.mxu0 0.0
    %887 = vmatprep.subr.mxu0 0.0
    %888 = vmatpush1.msra.mxu0 0.0
    %889 = vmatprep.subr.mxu0 0.0
    %890 = vmatpush1.msra.mxu0 0.0
    %891 = vmatprep.subr.mxu0 0.0
    %892 = vmatpush1.msra.mxu0 0.0
    %893 = vmatprep.subr.mxu0 0.0
    %894 = vmatpush1.msra.mxu0 0.0
    %895 = vmatprep.subr.mxu0 0.0
    %896 = vmatpush1.msra.mxu0 0.0
    %897 = vmatprep.subr.mxu0 0.0
    %898 = vmatpush1.msra.mxu0 0.0
    %899 = vmatprep.subr.mxu0 0.0
    %900 = vmatpush1.msra.mxu0 0.0
    %901 = vmatprep.subr.mxu0 0.0
    %902 = vmatpush1.msra.mxu0 0.0
    %903 = vmatprep.subr.mxu0 0.0
    %904 = vmatpush1.msra.mxu0 0.0
    %905 = vmatprep.subr.mxu0 0.0
    %906 = vmatpush1.msra.mxu0 0.0
    %907 = vmatprep.subr.mxu0 0.0
    %908 = vmatpush1.msra.mxu0 0.0
    %909 = vmatprep.subr.mxu0 0.0
    %910 = vmatpush1.msra.mxu0 0.0
    %911 = vmatprep.subr.mxu0 0.0
    %912 = vmatpush1.msra.mxu0 0.0
    %913 = vmatprep.subr.mxu0 0.0
    %914 = vmatpush1.msra.mxu0 0.0
    %915 = vmatprep.subr.mxu0 0.0
    %916 = vmatpush1.msra.mxu0 0.0
    %917 = vmatprep.subr.mxu0 0.0
    %918 = vmatpush1.msra.mxu0 0.0
    %919 = vmatprep.subr.mxu0 0.0
    %920 = vmatpush1.msra.mxu0 0.0
    %921 = vmatprep.subr.mxu0 0.0
    %922 = vmatpush1.msra.mxu0 0.0
    %923 = vmatprep.subr.mxu0 0.0
    %924 = vmatpush1.msra.mxu0 0.0
    %925 = vmatprep.subr.mxu0 0.0
    %926 = vmatpush1.msra.mxu0 0.0
    %927 = vmatprep.subr.mxu0 0.0
    %928 = vmatpush1.msra.mxu0 0.0
    %929 = vmatprep.subr.mxu0 0.0
    %930 = vmatpush1.msra.mxu0 0.0
    %931 = vmatprep.mubr.f32.mxu0 0.0
    %932 = vmatmul.mubr.f32.gmra.mrb[0].mxu0 %v865
    %v933 = vpop.f32.mrb[0].mxu0
    %v934 = vadd.f32 %v861, %v933
    %v935 = vpop.f32.mrb[0].mxu0
    %936 = vdwg.mxu0
    %v937 = vld [vmem:[%s3] sm:$0xff]
    %v938 = vadd.f32 %v934, %v937
    %v939 = vld [vmem:[%s6] sm:$0x1]
    %v940 = vld [vmem:[%s7] sm:$0x1]
    %v941 = vsel %vm844, %v938, 0.0
    %942 = vadd.xlane.f32.xlu0 %v941
    %v943 = vpop.xlane.xlu0 %942
    %v944 = vrcp.pop 32.0
    %v945 = vmul.f32 %v943, %v944
    %v946 = vsub.f32 %v938, %v945
    %v947 = vmul.f32 %v946, %v946
    %v948 = vsel %vm844, %v947, 0.0
    %949 = vadd.xlane.f32.xlu0 %v948
    %v950 = vpop.xlane.xlu0 %949
    %v951 = vmul.f32 %v950, %v944
    %v952 = vadd.f32 %v951, 1e-05
    %v953 = vrsqrt.pop %v952
    %v954 = vmul.f32 %v946, %v953
    %v956 = vlaneseq
    %v957 = vshrl.u32 %v956, 7
    %v958 = vsub.s32 0, %v957
    %v959 = vrot.slane %v939, %v958
    %v961 = vmul.f32 %v954, %v959
    %v963 = vlaneseq
    %v964 = vshrl.u32 %v963, 7
    %v965 = vsub.s32 0, %v964
    %v966 = vrot.slane %v940, %v965
    %v968 = vadd.f32 %v961, %v966
    %v969 = vld [vmem:[%s8] sm:$0xff]
    %v970 = vld [vmem:[%s8 + $0x8] sm:$0xff]
    %v971 = vld [vmem:[%s8 + $0x10] sm:$0xff]
    %v972 = vld [vmem:[%s8 + $0x18] sm:$0xff]
    %v973 = vld [vmem:[%s9] sm:$0x1]
    %v975 = vlaneseq
    %v976 = vshrl.u32 %v975, 7
    %v977 = vsub.s32 0, %v976
    %v978 = vrot.slane %v973, %v977
    %v981 = vsel %vm844, %v968, 0
    %983 = vmatprep.subr.mxu0 0.0
    %984 = vmatpush1.msra.mxu0 %v969
    %985 = vmatprep.subr.mxu0 0.0
    %986 = vmatpush1.msra.mxu0 %v970
    %987 = vmatprep.subr.mxu0 0.0
    %988 = vmatpush1.msra.mxu0 %v971
    %989 = vmatprep.subr.mxu0 0.0
    %990 = vmatpush1.msra.mxu0 %v972
    %991 = vmatprep.subr.mxu0 0.0
    %992 = vmatpush1.msra.mxu0 0.0
    %993 = vmatprep.subr.mxu0 0.0
    %994 = vmatpush1.msra.mxu0 0.0
    %995 = vmatprep.subr.mxu0 0.0
    %996 = vmatpush1.msra.mxu0 0.0
    %997 = vmatprep.subr.mxu0 0.0
    %998 = vmatpush1.msra.mxu0 0.0
    %999 = vmatprep.subr.mxu0 0.0
    %1000 = vmatpush1.msra.mxu0 0.0
    %1001 = vmatprep.subr.mxu0 0.0
    %1002 = vmatpush1.msra.mxu0 0.0
    %1003 = vmatprep.subr.mxu0 0.0
    %1004 = vmatpush1.msra.mxu0 0.0
    %1005 = vmatprep.subr.mxu0 0.0
    %1006 = vmatpush1.msra.mxu0 0.0
    %1007 = vmatprep.subr.mxu0 0.0
    %1008 = vmatpush1.msra.mxu0 0.0
    %1009 = vmatprep.subr.mxu0 0.0
    %1010 = vmatpush1.msra.mxu0 0.0
    %1011 = vmatprep.subr.mxu0 0.0
    %1012 = vmatpush1.msra.mxu0 0.0
    %1013 = vmatprep.subr.mxu0 0.0
    %1014 = vmatpush1.msra.mxu0 0.0
    %1015 = vmatprep.subr.mxu0 0.0
    %1016 = vmatpush1.msra.mxu0 0.0
    %1017 = vmatprep.subr.mxu0 0.0
    %1018 = vmatpush1.msra.mxu0 0.0
    %1019 = vmatprep.subr.mxu0 0.0
    %1020 = vmatpush1.msra.mxu0 0.0
    %1021 = vmatprep.subr.mxu0 0.0
    %1022 = vmatpush1.msra.mxu0 0.0
    %1023 = vmatprep.subr.mxu0 0.0
    %1024 = vmatpush1.msra.mxu0 0.0
    %1025 = vmatprep.subr.mxu0 0.0
    %1026 = vmatpush1.msra.mxu0 0.0
    %1027 = vmatprep.subr.mxu0 0.0
    %1028 = vmatpush1.msra.mxu0 0.0
    %1029 = vmatprep.subr.mxu0 0.0
    %1030 = vmatpush1.msra.mxu0 0.0
    %1031 = vmatprep.subr.mxu0 0.0
    %1032 = vmatpush1.msra.mxu0 0.0
    %1033 = vmatprep.subr.mxu0 0.0
    %1034 = vmatpush1.msra.mxu0 0.0
    %1035 = vmatprep.subr.mxu0 0.0
    %1036 = vmatpush1.msra.mxu0 0.0
    %1037 = vmatprep.subr.mxu0 0.0
    %1038 = vmatpush1.msra.mxu0 0.0
    %1039 = vmatprep.subr.mxu0 0.0
    %1040 = vmatpush1.msra.mxu0 0.0
    %1041 = vmatprep.subr.mxu0 0.0
    %1042 = vmatpush1.msra.mxu0 0.0
    %1043 = vmatprep.subr.mxu0 0.0
    %1044 = vmatpush1.msra.mxu0 0.0
    %1045 = vmatprep.subr.mxu0 0.0
    %1046 = vmatpush1.msra.mxu0 0.0
    %1047 = vmatprep.mubr.f32.mxu0 0.0
    %1048 = vmatmul.mubr.f32.gmra.mrb[0].mxu0 %v981
    %v1049 = vpop.f32.mrb[0].mxu0
    %v1050 = vadd.f32 %v978, %v1049
    %v1051 = vpop.f32.mrb[0].mxu0
    %1052 = vdwg.mxu0
    %v1053 = vmax.f32 %v1050, 0.0
    %v1054 = vld [vmem:[%s10] sm:$0xff]
    %v1055 = vld [vmem:[%s10 + $0x8] sm:$0xff]
    %v1056 = vld [vmem:[%s10 + $0x10] sm:$0xff]
    %v1057 = vld [vmem:[%s10 + $0x18] sm:$0xff]
    %v1058 = vld [vmem:[%s10 + $0x20] sm:$0xff]
    %v1059 = vld [vmem:[%s10 + $0x28] sm:$0xff]
    %v1060 = vld [vmem:[%s10 + $0x30] sm:$0xff]
    %v1061 = vld [vmem:[%s10 + $0x38] sm:$0xff]
    %v1062 = vld [vmem:[%s11] sm:$0x1]
    %v1064 = vlaneseq
    %v1065 = vshrl.u32 %v1064, 7
    %v1066 = vsub.s32 0, %v1065
    %v1067 = vrot.slane %v1062, %v1066
    %v1070 = vsel %vm863, %v1053, 0
    %1072 = vmatprep.subr.mxu0 0.0
    %1073 = vmatpush1.msra.mxu0 %v1054
    %1074 = vmatprep.subr.mxu0 0.0
    %1075 = vmatpush1.msra.mxu0 %v1055
    %1076 = vmatprep.subr.mxu0 0.0
    %1077 = vmatpush1.msra.mxu0 %v1056
    %1078 = vmatprep.subr.mxu0 0.0
    %1079 = vmatpush1.msra.mxu0 %v1057
    %1080 = vmatprep.subr.mxu0 0.0
    %1081 = vmatpush1.msra.mxu0 %v1058
    %1082 = vmatprep.subr.mxu0 0.0
    %1083 = vmatpush1.msra.mxu0 %v1059
    %1084 = vmatprep.subr.mxu0 0.0
    %1085 = vmatpush1.msra.mxu0 %v1060
    %1086 = vmatprep.subr.mxu0 0.0
    %1087 = vmatpush1.msra.mxu0 %v1061
    %1088 = vmatprep.subr.mxu0 0.0
    %1089 = vmatpush1.msra.mxu0 0.0
    %1090 = vmatprep.subr.mxu0 0.0
    %1091 = vmatpush1.msra.mxu0 0.0
    %1092 = vmatprep.subr.mxu0 0.0
    %1093 = vmatpush1.msra.mxu0 0.0
    %1094 = vmatprep.subr.mxu0 0.0
    %1095 = vmatpush1.msra.mxu0 0.0
    %1096 = vmatprep.subr.mxu0 0.0
    %1097 = vmatpush1.msra.mxu0 0.0
    %1098 = vmatprep.subr.mxu0 0.0
    %1099 = vmatpush1.msra.mxu0 0.0
    %1100 = vmatprep.subr.mxu0 0.0
    %1101 = vmatpush1.msra.mxu0 0.0
    %1102 = vmatprep.subr.mxu0 0.0
    %1103 = vmatpush1.msra.mxu0 0.0
    %1104 = vmatprep.subr.mxu0 0.0
    %1105 = vmatpush1.msra.mxu0 0.0
    %1106 = vmatprep.subr.mxu0 0.0
    %1107 = vmatpush1.msra.mxu0 0.0
    %1108 = vmatprep.subr.mxu0 0.0
    %1109 = vmatpush1.msra.mxu0 0.0
    %1110 = vmatprep.subr.mxu0 0.0
    %1111 = vmatpush1.msra.mxu0 0.0
    %1112 = vmatprep.subr.mxu0 0.0
    %1113 = vmatpush1.msra.mxu0 0.0
    %1114 = vmatprep.subr.mxu0 0.0
    %1115 = vmatpush1.msra.mxu0 0.0
    %1116 = vmatprep.subr.mxu0 0.0
    %1117 = vmatpush1.msra.mxu0 0.0
    %1118 = vmatprep.subr.mxu0 0.0
    %1119 = vmatpush1.msra.mxu0 0.0
    %1120 = vmatprep.subr.mxu0 0.0
    %1121 = vmatpush1.msra.mxu0 0.0
    %1122 = vmatprep.subr.mxu0 0.0
    %1123 = vmatpush1.msra.mxu0 0.0
    %1124 = vmatprep.subr.mxu0 0.0
    %1125 = vmatpush1.msra.mxu0 0.0
    %1126 = vmatprep.subr.mxu0 0.0
    %1127 = vmatpush1.msra.mxu0 0.0
    %1128 = vmatprep.subr.mxu0 0.0
    %1129 = vmatpush1.msra.mxu0 0.0
    %1130 = vmatprep.subr.mxu0 0.0
    %1131 = vmatpush1.msra.mxu0 0.0
    %1132 = vmatprep.subr.mxu0 0.0
    %1133 = vmatpush1.msra.mxu0 0.0
    %1134 = vmatprep.subr.mxu0 0.0
    %1135 = vmatpush1.msra.mxu0 0.0
    %1136 = vmatprep.mubr.f32.mxu0 0.0
    %1137 = vmatmul.mubr.f32.gmra.mrb[0].mxu0 %v1070
    %v1138 = vpop.f32.mrb[0].mxu0
    %v1139 = vadd.f32 %v1067, %v1138
    %v1140 = vpop.f32.mrb[0].mxu0
    %1141 = vdwg.mxu0
    %v1142 = vadd.f32 %v1139, %v1139
    %v1143 = vld [vmem:[%s12] sm:$0x1]
    %v1144 = vld [vmem:[%s13] sm:$0x1]
    %v1145 = vsel %vm844, %v1142, 0.0
    %1146 = vadd.xlane.f32.xlu0 %v1145
    %v1147 = vpop.xlane.xlu0 %1146
    %v1148 = vmul.f32 %v1147, %v944
    %v1149 = vsub.f32 %v1142, %v1148
    %v1150 = vmul.f32 %v1149, %v1149
    %v1151 = vsel %vm844, %v1150, 0.0
    %1152 = vadd.xlane.f32.xlu0 %v1151
    %v1153 = vpop.xlane.xlu0 %1152
    %v1154 = vmul.f32 %v1153, %v944
    %v1155 = vadd.f32 %v1154, 1e-05
    %v1156 = vrsqrt.pop %v1155
    %v1157 = vmul.f32 %v1149, %v1156
    %v1159 = vlaneseq
    %v1160 = vshrl.u32 %v1159, 7
    %v1161 = vsub.s32 0, %v1160
    %v1162 = vrot.slane %v1143, %v1161
    %v1164 = vmul.f32 %v1157, %v1162
    %v1166 = vlaneseq
    %v1167 = vshrl.u32 %v1166, 7
    %v1168 = vsub.s32 0, %v1167
    %v1169 = vrot.slane %v1144, %v1168
    %v1171 = vadd.f32 %v1164, %v1169
    %1172 = vst.msk [vmem:[#allocation2] sm:$0xff] %vm844, %v1171
    // Predicated region
    $region58: #{encoder_layer.3} parent=1 // pred_check
      _
    $region59: #{encoder_layer.3} parent=1 // pred_check_branch
      %1174 = sbr.rel (0) target = $region61
    $region60: #{encoder_layer.3} parent=1 // pred_region
      %s1176 = ssub.s32 128, 128
      %1177 = vsyncadd [#allocation3], %s1176
      %s1179 = sshll.u32 [#allocation2], 4
      %s1180 = int_to_ptr.vmem [resolvable:$true] %s1179
      %1182 = dma.vmem_to_hbm [thread:$0]  %s1180, 128, %s14, [#allocation3]
    $region61: #{encoder_layer.3} parent=1 // pred_fallthru
      _
    // Predicated region
    $region62: #{encoder_layer.3} parent=1 // pred_check
      _
    $region63: #{encoder_layer.3} parent=1 // pred_check_branch
      %1184 = sbr.rel (0) target = $region65
    $region64: #{encoder_layer.3} parent=1 // pred_region
      %1185 = dma.done [#allocation3], 128
    $region65: #{encoder_layer.3} parent=1 // pred_fallthru
      _
    %1186 = vsyncpa [#allocation3], 1

</llo_original>
